<compile_context>
chip_gen: v5e
topology: v5e:2x2
jax: 0.10.0
libtpu: 0.0.40
codegen_flags: <defaults>
</compile_context>

<pallas_src>
import jax
import jax.numpy as jnp
from jax import lax
from jax.experimental import pallas as pl
from jax.experimental.pallas import tpu as pltpu

B, S, D, H = 2, 8, 32, 4          # batch, seq, d_model, heads
DK = D // H                        # per-head dim


def mha_kernel(x_ref, mask_ref, wqkv_ref, bqkv_ref, wo_ref, bo_ref, out_ref):
    # ---- fused QKV projection for the whole (collapsed) batch ----
    # (B*S, 3D) @ (3D, 3D) + (1, 3D); 1/sqrt(d_k) already folded into the q block.
    qkv = jnp.dot(x_ref[...], wqkv_ref[...],
                  preferred_element_type=jnp.float32) + bqkv_ref[...]

    # additive mask bias computed once; m < 0.5 == (mask == 0) for the canonical 0/1 mask
    bias = jnp.where(mask_ref[...] < 0.5, -1e9, 0.0)                     # (B, 1, S)

    ctx_rows = []
    for b in range(B):                                  # static unroll (B = 2), no grid
        rows = qkv[b * S:(b + 1) * S, :]                                  # (S, 3D)
        qh = rows[:, 0 * D:1 * D].reshape(S, H, DK).transpose(1, 0, 2)    # (H, S, DK)
        kh = rows[:, 1 * D:2 * D].reshape(S, H, DK).transpose(1, 0, 2)
        vh = rows[:, 2 * D:3 * D].reshape(S, H, DK).transpose(1, 0, 2)

        # scores: contract DK of both operands, batch over heads (leading batch dim)
        s = lax.dot_general(qh, kh,
                            dimension_numbers=(((2,), (2,)), ((0,), (0,))),
                            preferred_element_type=jnp.float32)           # (H, S, S)
        s = s + bias[b:b + 1]                                             # (1,1,S) bcast

        # ---- softmax (denominator reciprocal goes to the EUP) ----
        s = s - jnp.max(s, axis=-1, keepdims=True)
        e = jnp.exp(s)
        p = e * pl.reciprocal(jnp.sum(e, axis=-1, keepdims=True), approx=True)
        # TODO(synk): training-mode dropout on p (p=0.1) not implemented (eval semantics).

        # context: contract key axis, batch over heads (leading batch dim)
        ctx = lax.dot_general(p, vh,
                              dimension_numbers=(((2,), (1,)), ((0,), (0,))),
                              preferred_element_type=jnp.float32)         # (H, S, DK)
        ctx_rows.append(ctx.transpose(1, 0, 2).reshape(S, D))             # (S, D)

    # concat both batches along sublanes -> single output-projection MXU pass
    concat = jnp.concatenate(ctx_rows, axis=0)                            # (B*S, D)
    out_ref[...] = jnp.dot(concat, wo_ref[...],
                           preferred_element_type=jnp.float32) + bo_ref[...]


def multi_head_attention(xq, xk, xv, mask, wq, bq, wk, bk, wv, bv, wo, bo):
    scale = 1.0 / (DK ** 0.5)
    zero = jnp.zeros((D, D), jnp.float32)
    # Block-diagonal fused QKV weight (handles cross-attention: each input gets its own
    # weight block) with the 1/sqrt(d_k) scale folded into the q block; fused bias to match.
    w_qkv = jnp.block([[wq * scale, zero, zero],
                       [zero,       wk,   zero],
                       [zero,       zero, wv]])                           # (3D, 3D)
    b_qkv = jnp.concatenate([bq * scale, bk, bv], axis=-1)                # (1, 3D)
    xcat = jnp.concatenate([xq, xk, xv], axis=-1).reshape(B * S, 3 * D)   # (B*S, 3D)

    # advisory cost hint for the XLA scheduler
    flops = (2 * (B * S) * (3 * D) * (3 * D)          # fused QKV projection
             + B * (2 * 2 * H * S * S * DK)           # scores + context matmuls
             + 2 * (B * S) * D * D)                   # output projection
    bytes_accessed = 4 * (B * S * 3 * D + B * S + 3 * D * 3 * D + 3 * D
                          + D * D + D + B * S * D)
    cost = pl.CostEstimate(flops=flops, transcendentals=B * H * S * S,
                           bytes_accessed=bytes_accessed)

    out2d = pl.pallas_call(
        mha_kernel,
        out_shape=jax.ShapeDtypeStruct((B * S, D), jnp.float32),
        grid_spec=pltpu.PrefetchScalarGridSpec(
            num_scalar_prefetch=0,
            grid=(1,),      # single step; batch folded in-kernel (grid overhead dominates
                            # at this size).  v7x alternative: grid=(B,) + "parallel".
            in_specs=[pl.BlockSpec((B * S, 3 * D), lambda i: (0, 0)),
                      pl.BlockSpec((B, 1, S),      lambda i: (0, 0, 0)),
                      pl.BlockSpec((3 * D, 3 * D), lambda i: (0, 0)),
                      pl.BlockSpec((1, 3 * D),     lambda i: (0, 0)),
                      pl.BlockSpec((D, D),         lambda i: (0, 0)),
                      pl.BlockSpec((1, D),         lambda i: (0, 0))],
            out_specs=pl.BlockSpec((B * S, D), lambda i: (0, 0))),
        compiler_params=pltpu.CompilerParams(dimension_semantics=("arbitrary",)),
        cost_estimate=cost,
    )(xcat, mask, w_qkv, b_qkv, wo, bo)
    return out2d.reshape(B, S, D)


def reference(xq, xk, xv, mask, wq, bq, wk, bk, wv, bv, wo, bo):
    q = xq @ wq + bq
    k = xk @ wk + bk
    v = xv @ wv + bv
    qh = q.reshape(B, S, H, DK).transpose(0, 2, 1, 3)
    kh = k.reshape(B, S, H, DK).transpose(0, 2, 1, 3)
    vh = v.reshape(B, S, H, DK).transpose(0, 2, 1, 3)
    s = jnp.einsum("bhqd,bhkd->bhqk", qh, kh) / (DK ** 0.5)
    s = jnp.where(mask[:, None, :, :] == 0.0, -1e9, s)
    p = jax.nn.softmax(s, axis=-1)
    o = jnp.einsum("bhqk,bhkd->bhqd", p, vh).transpose(0, 2, 1, 3).reshape(B, S, D)
    return o @ wo + bo


if __name__ == "__main__":
    key = jax.random.PRNGKey(0)
    keys = jax.random.split(key, 9)

    xq = jax.random.normal(keys[0], (B, S, D), jnp.float32)
    xk = jax.random.normal(keys[1], (B, S, D), jnp.float32)
    xv = jax.random.normal(keys[2], (B, S, D), jnp.float32)
    # mask: last 2 key positions masked out for every batch element (0 = masked)
    mask = jnp.broadcast_to(
        (jnp.arange(S) < S - 2).astype(jnp.float32)[None, None, :], (B, 1, S))

    def w(k_, shape):
        return 0.1 * jax.random.normal(k_, shape, jnp.float32)

    wq, wk, wv, wo = (w(keys[3], (D, D)), w(keys[4], (D, D)),
                      w(keys[5], (D, D)), w(keys[6], (D, D)))
    bkeys = jax.random.split(keys[7], 4)
    bq, bk, bv, bo = [0.1 * jax.random.normal(bk_, (1, D), jnp.float32) for bk_ in bkeys]

    params = (wq, bq, wk, bk, wv, bv, wo, bo)

    out = multi_head_attention(xq, xk, xv, mask, *params)
    out = jax.block_until_ready(out)

    out_ref = reference(xq, xk, xv, mask, *params)
    assert out.shape == (B, S, D)
    max_err = jnp.max(jnp.abs(out - out_ref))
    assert jnp.allclose(out, out_ref, atol=2e-3, rtol=2e-3), f"max abs err {max_err}"

    print("KERNEL_OK")
</pallas_src>

<mosaic_0001>
module attributes {stable_mosaic.version = 11 : i64} {
  func.func @mha_kernel(%arg0: i32, %arg1: memref<16x96xf32, #tpu.memory_space<vmem>>, %arg2: memref<2x1x8xf32, #tpu.memory_space<vmem>>, %arg3: memref<96x96xf32, #tpu.memory_space<vmem>>, %arg4: memref<1x96xf32, #tpu.memory_space<vmem>>, %arg5: memref<32x32xf32, #tpu.memory_space<vmem>>, %arg6: memref<1x32xf32, #tpu.memory_space<vmem>>, %arg7: memref<16x32xf32, #tpu.memory_space<vmem>>) attributes {dimension_semantics = [#tpu.dimension_semantics<arbitrary>], iteration_bounds = array<i64: 1>, scalar_prefetch = 0 : i64, scratch_operands = 0 : i64, tpu.core_type = #tpu.core_type<tc>, window_params = [{pipeline_mode = #tpu.pipeline_mode<synchronous>, transform_indices = @transform_0, window_bounds = array<i64: 16, 96>}, {pipeline_mode = #tpu.pipeline_mode<synchronous>, transform_indices = @transform_1, window_bounds = array<i64: 2, 1, 8>}, {pipeline_mode = #tpu.pipeline_mode<synchronous>, transform_indices = @transform_2, window_bounds = array<i64: 96, 96>}, {pipeline_mode = #tpu.pipeline_mode<synchronous>, transform_indices = @transform_3, window_bounds = array<i64: 1, 96>}, {pipeline_mode = #tpu.pipeline_mode<synchronous>, transform_indices = @transform_4, window_bounds = array<i64: 32, 32>}, {pipeline_mode = #tpu.pipeline_mode<synchronous>, transform_indices = @transform_5, window_bounds = array<i64: 1, 32>}, {pipeline_mode = #tpu.pipeline_mode<synchronous>, transform_indices = @transform_6, window_bounds = array<i64: 16, 32>}]} {
    %c0 = arith.constant 0 : index
    %c0_0 = arith.constant 0 : index
    %0 = vector.load %arg1[%c0, %c0_0] : memref<16x96xf32, #tpu.memory_space<vmem>>, vector<16x96xf32>
    %c0_1 = arith.constant 0 : index
    %c0_2 = arith.constant 0 : index
    %1 = vector.load %arg3[%c0_1, %c0_2] : memref<96x96xf32, #tpu.memory_space<vmem>>, vector<96x96xf32>
    %cst = arith.constant dense<0.000000e+00> : vector<16x96xf32>
    %2 = tpu.matmul %0, %1, %cst {dimension_numbers = #tpu.dot_dimension_numbers<[1], [0], [0], [1], [0, 0, 1, 1], [], []>} : vector<16x96xf32>, vector<96x96xf32>, vector<16x96xf32> -> vector<16x96xf32>
    %c0_3 = arith.constant 0 : index
    %c0_4 = arith.constant 0 : index
    %3 = vector.load %arg4[%c0_3, %c0_4] : memref<1x96xf32, #tpu.memory_space<vmem>>, vector<1x96xf32>
    %4 = vector.broadcast %3 : vector<1x96xf32> to vector<16x96xf32>
    %5 = arith.addf %2, %4 : vector<16x96xf32>
    %c0_5 = arith.constant 0 : index
    %c0_6 = arith.constant 0 : index
    %c0_7 = arith.constant 0 : index
    %6 = vector.load %arg2[%c0_5, %c0_6, %c0_7] : memref<2x1x8xf32, #tpu.memory_space<vmem>>, vector<2x1x8xf32>
    %cst_8 = arith.constant 5.000000e-01 : f32
    %7 = vector.broadcast %cst_8 : f32 to vector<2x1x8xf32>
    %8 = arith.cmpf olt, %6, %7 : vector<2x1x8xf32>
    %cst_9 = arith.constant -1.000000e+09 : f32
    %cst_10 = arith.constant 0.000000e+00 : f32
    %9 = vector.broadcast %cst_9 : f32 to vector<2x1x8xf32>
    %10 = vector.broadcast %cst_10 : f32 to vector<2x1x8xf32>
    %11 = arith.select %8, %9, %10 : vector<2x1x8xi1>, vector<2x1x8xf32>
    %12 = vector.extract_strided_slice %5 {offsets = [0, 0], sizes = [8, 96], strides = [1, 1]} : vector<16x96xf32> to vector<8x96xf32>
    %13 = vector.extract_strided_slice %12 {offsets = [0, 0], sizes = [8, 32], strides = [1, 1]} : vector<8x96xf32> to vector<8x32xf32>
    %14 = vector.shape_cast %13 : vector<8x32xf32> to vector<8x4x8xf32>
    %15 = tpu.transpose %14, [1, 0, 2] : vector<8x4x8xf32> -> vector<4x8x8xf32>
    %16 = vector.extract_strided_slice %12 {offsets = [0, 32], sizes = [8, 32], strides = [1, 1]} : vector<8x96xf32> to vector<8x32xf32>
    %17 = vector.shape_cast %16 : vector<8x32xf32> to vector<8x4x8xf32>
    %18 = tpu.transpose %17, [1, 0, 2] : vector<8x4x8xf32> -> vector<4x8x8xf32>
    %19 = vector.extract_strided_slice %12 {offsets = [0, 64], sizes = [8, 32], strides = [1, 1]} : vector<8x96xf32> to vector<8x32xf32>
    %20 = vector.shape_cast %19 : vector<8x32xf32> to vector<8x4x8xf32>
    %21 = tpu.transpose %20, [1, 0, 2] : vector<8x4x8xf32> -> vector<4x8x8xf32>
    %cst_11 = arith.constant dense<0.000000e+00> : vector<4x8x8xf32>
    %22 = tpu.matmul %15, %18, %cst_11 {dimension_numbers = #tpu.dot_dimension_numbers<[2], [2], [1], [1], [0, 0, 0, 1, 1, 1], [0], [0]>} : vector<4x8x8xf32>, vector<4x8x8xf32>, vector<4x8x8xf32> -> vector<4x8x8xf32>
    %23 = vector.extract_strided_slice %11 {offsets = [0, 0, 0], sizes = [1, 1, 8], strides = [1, 1, 1]} : vector<2x1x8xf32> to vector<1x1x8xf32>
    %24 = vector.broadcast %23 : vector<1x1x8xf32> to vector<4x8x8xf32>
    %25 = arith.addf %22, %24 : vector<4x8x8xf32>
    %cst_12 = arith.constant dense<0xFF800000> : vector<4x8xf32>
    %26 = vector.multi_reduction <maximumf>, %25, %cst_12 [2] : vector<4x8x8xf32> to vector<4x8xf32>
    %27 = vector.shape_cast %26 : vector<4x8xf32> to vector<4x8x1xf32>
    %28 = vector.broadcast %27 : vector<4x8x1xf32> to vector<4x8x8xf32>
    %29 = arith.subf %25, %28 : vector<4x8x8xf32>
    %30 = math.exp %29 : vector<4x8x8xf32>
    %cst_13 = arith.constant dense<0.000000e+00> : vector<4x8xf32>
    %31 = vector.multi_reduction <add>, %30, %cst_13 [2] : vector<4x8x8xf32> to vector<4x8xf32>
    %32 = vector.shape_cast %31 : vector<4x8xf32> to vector<4x8x1xf32>
    %33 = tpu.reciprocal %32 {approx = true} : vector<4x8x1xf32> -> vector<4x8x1xf32>
    %34 = vector.broadcast %33 : vector<4x8x1xf32> to vector<4x8x8xf32>
    %35 = arith.mulf %30, %34 : vector<4x8x8xf32>
    %cst_14 = arith.constant dense<0.000000e+00> : vector<4x8x8xf32>
    %36 = tpu.matmul %35, %21, %cst_14 {dimension_numbers = #tpu.dot_dimension_numbers<[2], [1], [1], [2], [0, 0, 0, 1, 1, 2], [0], [0]>} : vector<4x8x8xf32>, vector<4x8x8xf32>, vector<4x8x8xf32> -> vector<4x8x8xf32>
    %37 = tpu.transpose %36, [1, 0, 2] : vector<4x8x8xf32> -> vector<8x4x8xf32>
    %38 = vector.shape_cast %37 : vector<8x4x8xf32> to vector<8x32xf32>
    %39 = vector.extract_strided_slice %5 {offsets = [8, 0], sizes = [8, 96], strides = [1, 1]} : vector<16x96xf32> to vector<8x96xf32>
    %40 = vector.extract_strided_slice %39 {offsets = [0, 0], sizes = [8, 32], strides = [1, 1]} : vector<8x96xf32> to vector<8x32xf32>
    %41 = vector.shape_cast %40 : vector<8x32xf32> to vector<8x4x8xf32>
    %42 = tpu.transpose %41, [1, 0, 2] : vector<8x4x8xf32> -> vector<4x8x8xf32>
    %43 = vector.extract_strided_slice %39 {offsets = [0, 32], sizes = [8, 32], strides = [1, 1]} : vector<8x96xf32> to vector<8x32xf32>
    %44 = vector.shape_cast %43 : vector<8x32xf32> to vector<8x4x8xf32>
    %45 = tpu.transpose %44, [1, 0, 2] : vector<8x4x8xf32> -> vector<4x8x8xf32>
    %46 = vector.extract_strided_slice %39 {offsets = [0, 64], sizes = [8, 32], strides = [1, 1]} : vector<8x96xf32> to vector<8x32xf32>
    %47 = vector.shape_cast %46 : vector<8x32xf32> to vector<8x4x8xf32>
    %48 = tpu.transpose %47, [1, 0, 2] : vector<8x4x8xf32> -> vector<4x8x8xf32>
    %cst_15 = arith.constant dense<0.000000e+00> : vector<4x8x8xf32>
    %49 = tpu.matmul %42, %45, %cst_15 {dimension_numbers = #tpu.dot_dimension_numbers<[2], [2], [1], [1], [0, 0, 0, 1, 1, 1], [0], [0]>} : vector<4x8x8xf32>, vector<4x8x8xf32>, vector<4x8x8xf32> -> vector<4x8x8xf32>
    %50 = vector.extract_strided_slice %11 {offsets = [1, 0, 0], sizes = [1, 1, 8], strides = [1, 1, 1]} : vector<2x1x8xf32> to vector<1x1x8xf32>
    %51 = vector.broadcast %50 : vector<1x1x8xf32> to vector<4x8x8xf32>
    %52 = arith.addf %49, %51 : vector<4x8x8xf32>
    %cst_16 = arith.constant dense<0xFF800000> : vector<4x8xf32>
    %53 = vector.multi_reduction <maximumf>, %52, %cst_16 [2] : vector<4x8x8xf32> to vector<4x8xf32>
    %54 = vector.shape_cast %53 : vector<4x8xf32> to vector<4x8x1xf32>
    %55 = vector.broadcast %54 : vector<4x8x1xf32> to vector<4x8x8xf32>
    %56 = arith.subf %52, %55 : vector<4x8x8xf32>
    %57 = math.exp %56 : vector<4x8x8xf32>
    %cst_17 = arith.constant dense<0.000000e+00> : vector<4x8xf32>
    %58 = vector.multi_reduction <add>, %57, %cst_17 [2] : vector<4x8x8xf32> to vector<4x8xf32>
    %59 = vector.shape_cast %58 : vector<4x8xf32> to vector<4x8x1xf32>
    %60 = tpu.reciprocal %59 {approx = true} : vector<4x8x1xf32> -> vector<4x8x1xf32>
    %61 = vector.broadcast %60 : vector<4x8x1xf32> to vector<4x8x8xf32>
    %62 = arith.mulf %57, %61 : vector<4x8x8xf32>
    %cst_18 = arith.constant dense<0.000000e+00> : vector<4x8x8xf32>
    %63 = tpu.matmul %62, %48, %cst_18 {dimension_numbers = #tpu.dot_dimension_numbers<[2], [1], [1], [2], [0, 0, 0, 1, 1, 2], [0], [0]>} : vector<4x8x8xf32>, vector<4x8x8xf32>, vector<4x8x8xf32> -> vector<4x8x8xf32>
    %64 = tpu.transpose %63, [1, 0, 2] : vector<4x8x8xf32> -> vector<8x4x8xf32>
    %65 = vector.shape_cast %64 : vector<8x4x8xf32> to vector<8x32xf32>
    %66 = tpu.concatenate %38, %65 in 0 : vector<8x32xf32>, vector<8x32xf32> -> vector<16x32xf32>
    %c0_19 = arith.constant 0 : index
    %c0_20 = arith.constant 0 : index
    %67 = vector.load %arg5[%c0_19, %c0_20] : memref<32x32xf32, #tpu.memory_space<vmem>>, vector<32x32xf32>
    %cst_21 = arith.constant dense<0.000000e+00> : vector<16x32xf32>
    %68 = tpu.matmul %66, %67, %cst_21 {dimension_numbers = #tpu.dot_dimension_numbers<[1], [0], [0], [1], [0, 0, 1, 1], [], []>} : vector<16x32xf32>, vector<32x32xf32>, vector<16x32xf32> -> vector<16x32xf32>
    %c0_22 = arith.constant 0 : index
    %c0_23 = arith.constant 0 : index
    %69 = vector.load %arg6[%c0_22, %c0_23] : memref<1x32xf32, #tpu.memory_space<vmem>>, vector<1x32xf32>
    %70 = vector.broadcast %69 : vector<1x32xf32> to vector<16x32xf32>
    %71 = arith.addf %68, %70 : vector<16x32xf32>
    %c0_24 = arith.constant 0 : index
    %c0_25 = arith.constant 0 : index
    %72 = vector.load %arg7[%c0_24, %c0_25] : memref<16x32xf32, #tpu.memory_space<vmem>>, vector<16x32xf32>
    tpu.vector_store %arg7[%c0_24, %c0_25], %71 {strides = array<i32>} : memref<16x32xf32, #tpu.memory_space<vmem>>, vector<16x32xf32>,
    return
  }
  func.func @transform_0(%arg0: i32) -> (i32, i32) {
    %c0_i32 = arith.constant 0 : i32
    %c0_i32_0 = arith.constant 0 : i32
    %c0_i32_1 = arith.constant 0 : i32
    return %c0_i32, %c0_i32_0 : i32, i32
  }
  func.func @transform_1(%arg0: i32) -> (i32, i32, i32) {
    %c0_i32 = arith.constant 0 : i32
    %c0_i32_0 = arith.constant 0 : i32
    %c0_i32_1 = arith.constant 0 : i32
    %c0_i32_2 = arith.constant 0 : i32
    return %c0_i32, %c0_i32_0, %c0_i32_1 : i32, i32, i32
  }
  func.func @transform_2(%arg0: i32) -> (i32, i32) {
    %c0_i32 = arith.constant 0 : i32
    %c0_i32_0 = arith.constant 0 : i32
    %c0_i32_1 = arith.constant 0 : i32
    return %c0_i32, %c0_i32_0 : i32, i32
  }
  func.func @transform_3(%arg0: i32) -> (i32, i32) {
    %c0_i32 = arith.constant 0 : i32
    %c0_i32_0 = arith.constant 0 : i32
    %c0_i32_1 = arith.constant 0 : i32
    return %c0_i32, %c0_i32_0 : i32, i32
  }
  func.func @transform_4(%arg0: i32) -> (i32, i32) {
    %c0_i32 = arith.constant 0 : i32
    %c0_i32_0 = arith.constant 0 : i32
    %c0_i32_1 = arith.constant 0 : i32
    return %c0_i32, %c0_i32_0 : i32, i32
  }
  func.func @transform_5(%arg0: i32) -> (i32, i32) {
    %c0_i32 = arith.constant 0 : i32
    %c0_i32_0 = arith.constant 0 : i32
    %c0_i32_1 = arith.constant 0 : i32
    return %c0_i32, %c0_i32_0 : i32, i32
  }
  func.func @transform_6(%arg0: i32) -> (i32, i32) {
    %c0_i32 = arith.constant 0 : i32
    %c0_i32_0 = arith.constant 0 : i32
    %c0_i32_1 = arith.constant 0 : i32
    return %c0_i32, %c0_i32_0 : i32, i32
  }
}

</mosaic_0001>

<llo_original>
// kernel: tpu_custom_call.1
$region0: #{tpu_custom_call.1}
  #allocation0 [shape = 'u32[]', space=smem, size = 0x4, offset = 0x4, fixed_abs, tag = 'smem constant byte address 0x4 - core index']
  #allocation1 [shape = 'u32[72,128]{1,0:T(1,128)}', space=vmem, size = 0x9000, scoped, tag = 'internal scratch']
  %s0 = inlined_call_operand.hbm [shape: f32[16,96], index: 0, kind: input, shape index: {}]
  %s1 = inlined_call_operand.hbm [shape: f32[2,1,8], index: 1, kind: input, shape index: {}]
  %s2 = inlined_call_operand.hbm [shape: f32[96,96], index: 2, kind: input, shape index: {}]
  %s3 = inlined_call_operand.vmem [shape: f32[1,96], index: 3, kind: input, shape index: {}]
  %s4 = inlined_call_operand.hbm [shape: f32[32,32], index: 4, kind: input, shape index: {}]
  %s5 = inlined_call_operand.vmem [shape: f32[1,32], index: 5, kind: input, shape index: {}]
  %s6 = inlined_call_operand.hbm [shape: f32[16,32], index: 6, kind: output, shape index: {}]
  %s7 = sld [smem:[#allocation0]]
  $region50: #{tpu_custom_call.1} parent=0
    _
  %s9 = ssub.s32 1, %s7
  %s10 = scalar_select 0, %s9, %s7
  $region1: #{tpu_custom_call.1} parent=0
    #allocation2 [shape = 'u8[8192]{0}', space=vmem, size = 0x2000, scoped, tag = 'input window, operand 0, single buffered']
    #allocation3 [shape = 's32[1]{0}', space=sflag, size = 0x4, scoped, tag = 'scoped memory for tpu_custom_call.1']
    #allocation4 [shape = 's32[1]{0}', space=sflag, size = 0x4, scoped, tag = 'scoped memory for tpu_custom_call.1']
    #allocation5 [shape = 'u8[1024]{0}', space=vmem, size = 0x400, scoped, tag = 'input window, operand 1, single buffered']
    #allocation6 [shape = 's32[1]{0}', space=sflag, size = 0x4, scoped, tag = 'scoped memory for tpu_custom_call.1']
    #allocation7 [shape = 'u8[49152]{0}', space=vmem, size = 0xc000, scoped, tag = 'input window, operand 2, single buffered']
    #allocation8 [shape = 'u8[16384]{0}', space=vmem, size = 0x4000, scoped, tag = 'input window, operand 4, single buffered']
    #allocation9 [shape = 's32[1]{0}', space=sflag, size = 0x4, scoped, tag = 'scoped memory for tpu_custom_call.1']
    #allocation10 [shape = 'u8[8192]{0}', space=vmem, size = 0x2000, scoped, tag = 'output window, operand 0, single buffered']
    %11 = vsyncpa [#allocation3], 0
    %12 = vsyncpa [#allocation6], 0
    %13 = vsyncpa [#allocation9], 0
    %14 = vsyncpa [#allocation4], 0
    // Predicated region
    $region2: #{tpu_custom_call.1} parent=1 // pred_check
      _
    $region3: #{tpu_custom_call.1} parent=1 // pred_check_branch
      %16 = sbr.rel (0) target = $region5
    $region4: #{tpu_custom_call.1} parent=1 // pred_region
      %18 = vsyncadd [#allocation3], 0
      %s19 = sshll.u32 %s0, 4
      %s20 = int_to_ptr.hbm [resolvable:$true] %s19
      %s21 = sshll.u32 [#allocation2], 4
      %s22 = int_to_ptr.vmem [resolvable:$true] %s21
      %27 = dma.hbm_to_vmem [thread:$0]  %s20, 256, %s22, [#allocation3], 128, 128, 8
    $region5: #{tpu_custom_call.1} parent=1 // pred_fallthru
      _
    // Predicated region
    $region6: #{tpu_custom_call.1} parent=1 // pred_check
      _
    $region7: #{tpu_custom_call.1} parent=1 // pred_check_branch
      %29 = sbr.rel (0) target = $region9
    $region8: #{tpu_custom_call.1} parent=1 // pred_region
      %31 = vsyncadd [#allocation6], 0
      %s32 = sshll.u32 %s1, 4
      %s33 = int_to_ptr.hbm [resolvable:$true] %s32
      %s34 = sshll.u32 [#allocation5], 4
      %s35 = int_to_ptr.vmem [resolvable:$true] %s34
      %40 = dma.hbm_to_vmem [thread:$0]  %s33, 32, %s35, [#allocation6], 16, 16, 1
    $region9: #{tpu_custom_call.1} parent=1 // pred_fallthru
      _
    // Predicated region
    $region10: #{tpu_custom_call.1} parent=1 // pred_check
      _
    $region11: #{tpu_custom_call.1} parent=1 // pred_check_branch
      %42 = sbr.rel (0) target = $region13
    $region12: #{tpu_custom_call.1} parent=1 // pred_region
      %44 = vsyncadd [#allocation6], 0
      %s45 = sshll.u32 %s2, 4
      %s46 = int_to_ptr.hbm [resolvable:$true] %s45
      %s47 = sshll.u32 [#allocation7], 4
      %s48 = int_to_ptr.vmem [resolvable:$true] %s47
      %53 = dma.hbm_to_vmem [thread:$0]  %s46, 1536, %s48, [#allocation6], 128, 128, 8
    $region13: #{tpu_custom_call.1} parent=1 // pred_fallthru
      _
    // Predicated region
    $region14: #{tpu_custom_call.1} parent=1 // pred_check
      _
    $region15: #{tpu_custom_call.1} parent=1 // pred_check_branch
      %55 = sbr.rel (0) target = $region17
    $region16: #{tpu_custom_call.1} parent=1 // pred_region
      _
    $region17: #{tpu_custom_call.1} parent=1 // pred_fallthru
      _
    // Predicated region
    $region18: #{tpu_custom_call.1} parent=1 // pred_check
      _
    $region19: #{tpu_custom_call.1} parent=1 // pred_check_branch
      %57 = sbr.rel (0) target = $region21
    $region20: #{tpu_custom_call.1} parent=1 // pred_region
      %59 = vsyncadd [#allocation9], 0
      %s60 = sshll.u32 %s4, 4
      %s61 = int_to_ptr.hbm [resolvable:$true] %s60
      %s62 = sshll.u32 [#allocation8], 4
      %s63 = int_to_ptr.vmem [resolvable:$true] %s62
      %68 = dma.hbm_to_vmem [thread:$0]  %s61, 512, %s63, [#allocation9], 128, 128, 8
    $region21: #{tpu_custom_call.1} parent=1 // pred_fallthru
      _
    // Predicated region
    $region22: #{tpu_custom_call.1} parent=1 // pred_check
      _
    $region23: #{tpu_custom_call.1} parent=1 // pred_check_branch
      %70 = sbr.rel (0) target = $region25
    $region24: #{tpu_custom_call.1} parent=1 // pred_region
      _
    $region25: #{tpu_custom_call.1} parent=1 // pred_fallthru
      _
    // Predicated region
    $region26: #{tpu_custom_call.1} parent=1 // pred_check
      _
    $region27: #{tpu_custom_call.1} parent=1 // pred_check_branch
      %72 = sbr.rel (0) target = $region29
    $region28: #{tpu_custom_call.1} parent=1 // pred_region
      %74 = dma.done [#allocation3], 256
    $region29: #{tpu_custom_call.1} parent=1 // pred_fallthru
      _
    // Predicated region
    $region30: #{tpu_custom_call.1} parent=1 // pred_check
      _
    $region31: #{tpu_custom_call.1} parent=1 // pred_check_branch
      %76 = sbr.rel (0) target = $region33
    $region32: #{tpu_custom_call.1} parent=1 // pred_region
      %78 = dma.done [#allocation6], 32
    $region33: #{tpu_custom_call.1} parent=1 // pred_fallthru
      _
    // Predicated region
    $region34: #{tpu_custom_call.1} parent=1 // pred_check
      _
    $region35: #{tpu_custom_call.1} parent=1 // pred_check_branch
      %80 = sbr.rel (0) target = $region37
    $region36: #{tpu_custom_call.1} parent=1 // pred_region
      %82 = dma.done [#allocation6], 1536
    $region37: #{tpu_custom_call.1} parent=1 // pred_fallthru
      _
    // Predicated region
    $region38: #{tpu_custom_call.1} parent=1 // pred_check
      _
    $region39: #{tpu_custom_call.1} parent=1 // pred_check_branch
      %84 = sbr.rel (0) target = $region41
    $region40: #{tpu_custom_call.1} parent=1 // pred_region
      %86 = dma.done [#allocation9], 512
    $region41: #{tpu_custom_call.1} parent=1 // pred_fallthru
      _
    %v87 = vld [vmem:[#allocation2] sm:$0xff]
    %v88 = vld [vmem:[#allocation2 + $0x8] sm:$0xff]
    %v89 = vld [vmem:[#allocation7] sm:$0xff]
    %v90 = vld [vmem:[#allocation7 + $0x8] sm:$0xff]
    %v91 = vld [vmem:[#allocation7 + $0x10] sm:$0xff]
    %v92 = vld [vmem:[#allocation7 + $0x18] sm:$0xff]
    %v93 = vld [vmem:[#allocation7 + $0x20] sm:$0xff]
    %v94 = vld [vmem:[#allocation7 + $0x28] sm:$0xff]
    %v95 = vld [vmem:[#allocation7 + $0x30] sm:$0xff]
    %v96 = vld [vmem:[#allocation7 + $0x38] sm:$0xff]
    %v97 = vld [vmem:[#allocation7 + $0x40] sm:$0xff]
    %v98 = vld [vmem:[#allocation7 + $0x48] sm:$0xff]
    %v99 = vld [vmem:[#allocation7 + $0x50] sm:$0xff]
    %v100 = vld [vmem:[#allocation7 + $0x58] sm:$0xff]
    %v101 = vld [vmem:[%s3] sm:$0x1]
    %v103 = vperm.slane %v101, 0
    %vm105 = vcmask 785408
    %v107 = vsel %vm105, %v87, 0
    %v110 = vsel %vm105, %v88, 0
    %112 = vmatpush.msra.mxu0 0.0
    %113 = vmatpush.msra.mxu0 0.0
    %114 = vmatpush.msra.mxu0 0.0
    %115 = vmatpush.msra.mxu0 0.0
    %116 = vmatpush.msra.mxu0 %v100
    %117 = vmatpush.msra.mxu0 %v99
    %118 = vmatpush.msra.mxu0 %v98
    %119 = vmatpush.msra.mxu0 %v97
    %120 = vmatpush.msra.mxu0 %v96
    %121 = vmatpush.msra.mxu0 %v95
    %122 = vmatpush.msra.mxu0 %v94
    %123 = vmatpush.msra.mxu0 %v93
    %124 = vmatpush.msra.mxu0 %v92
    %125 = vmatpush.msra.mxu0 %v91
    %126 = vmatpush.msra.mxu0 %v90
    %127 = vmatpush.msra.mxu0 %v89
    %128 = vmatmul.f32.gmra.mxu0 %v107
    %v129 = vpop.f32.mrf.mxu0
    %v130 = vadd.f32 %v103, %v129
    %131 = vmatmul.f32.gmra.mxu0 %v110
    %v132 = vpop.f32.mrf.mxu0
    %v133 = vadd.f32 %v103, %v132
    %134 = vdwg.mxu0
    %v135 = vld [vmem:[#allocation5] sm:$0x1]
    %v136 = vld [vmem:[#allocation5 + $0x1] sm:$0x1]
    %vm137 = vcmp.lt.f32.partialorder %v135, 0.5
    %vm138 = vcmp.lt.f32.partialorder %v136, 0.5
    %v139 = vsel %vm137, -1e+09, 0.0
    %v140 = vsel %vm138, -1e+09, 0.0
    %142 = vrot.lane.b32.xlu0 %v130, 120
    %v143 = vpop.permute.xlu0 %142
    %145 = vrot.lane.b32.xlu0 %v130, 112
    %v146 = vpop.permute.xlu0 %145
    %148 = vrot.lane.b32.xlu0 %v130, 104
    %v149 = vpop.permute.xlu0 %148
    %v151 = vrot.slane %v146, 4
    %vm152 = vcmask 1047556
    %v153 = vsel %vm152, %v151, %v130
    %v154 = vrot.slane %v130, 4
    %v155 = vsel %vm152, %v146, %v154
    %v157 = vunpack.c.l.s4 1983009808
    %v158 = vunpack.c.0.s8 %v157
    %v159 = vperm.slane %v153, %v158
    %v161 = vunpack.c.l.s4 1983009808
    %v162 = vunpack.c.0.s8 %v161
    %v163 = vperm.slane %v155, %v162
    %v164 = vrot.slane %v149, 4
    %v165 = vsel %vm152, %v164, %v143
    %v166 = vrot.slane %v143, 4
    %v167 = vsel %vm152, %v149, %v166
    %v169 = vunpack.c.l.s4 1983009808
    %v170 = vunpack.c.0.s8 %v169
    %v171 = vperm.slane %v165, %v170
    %v173 = vunpack.c.l.s4 1983009808
    %v174 = vunpack.c.0.s8 %v173
    %v175 = vperm.slane %v167, %v174
    %v176 = vrot.slane %v171, 4
    %v177 = vsel %vm152, %v176, %v159
    %v178 = vrot.slane %v159, 4
    %v179 = vsel %vm152, %v171, %v178
    %v181 = vunpack.c.l.s4 1934713408
    %v182 = vunpack.c.0.s8 %v181
    %v183 = vperm.slane %v177, %v182
    %v185 = vunpack.c.l.s4 1934713408
    %v186 = vunpack.c.0.s8 %v185
    %v187 = vperm.slane %v179, %v186
    %v188 = vrot.slane %v175, 4
    %v189 = vsel %vm152, %v188, %v163
    %v190 = vrot.slane %v163, 4
    %v191 = vsel %vm152, %v175, %v190
    %v193 = vunpack.c.l.s4 1934713408
    %v194 = vunpack.c.0.s8 %v193
    %v195 = vperm.slane %v189, %v194
    %v197 = vunpack.c.l.s4 1934713408
    %v198 = vunpack.c.0.s8 %v197
    %v199 = vperm.slane %v191, %v198
    %v200 = vrot.slane %v183, 4
    %v201 = vsel %vm152, 0.0, %v200
    %v202 = vrot.slane %v187, 4
    %v203 = vsel %vm152, 0.0, %v202
    %v204 = vrot.slane %v195, 4
    %v205 = vsel %vm152, 0.0, %v204
    %v206 = vrot.slane %v199, 4
    %v207 = vsel %vm152, 0.0, %v206
    %v208 = vsel %vm152, %v202, %v183
    %v210 = vunpack.c.l.s4 1983009808
    %v211 = vunpack.c.0.s8 %v210
    %v212 = vperm.slane %v208, %v211
    %v213 = vrot.slane %v203, 4
    %v214 = vsel %vm152, %v213, %v201
    %v216 = vunpack.c.l.s4 1983009808
    %v217 = vunpack.c.0.s8 %v216
    %v218 = vperm.slane %v214, %v217
    %v219 = vsel %vm152, %v206, %v195
    %v221 = vunpack.c.l.s4 1983009808
    %v222 = vunpack.c.0.s8 %v221
    %v223 = vperm.slane %v219, %v222
    %v224 = vrot.slane %v207, 4
    %v225 = vsel %vm152, %v224, %v205
    %v227 = vunpack.c.l.s4 1983009808
    %v228 = vunpack.c.0.s8 %v227
    %v229 = vperm.slane %v225, %v228
    %v230 = vrot.slane %v218, 4
    %v231 = vsel %vm152, %v230, %v212
    %v232 = vrot.slane %v212, 4
    %v233 = vsel %vm152, %v218, %v232
    %v235 = vunpack.c.l.s4 1934713408
    %v236 = vunpack.c.0.s8 %v235
    %v237 = vperm.slane %v231, %v236
    %v239 = vunpack.c.l.s4 1934713408
    %v240 = vunpack.c.0.s8 %v239
    %v241 = vperm.slane %v233, %v240
    %v242 = vrot.slane %v229, 4
    %v243 = vsel %vm152, %v242, %v223
    %v244 = vrot.slane %v223, 4
    %v245 = vsel %vm152, %v229, %v244
    %v247 = vunpack.c.l.s4 1934713408
    %v248 = vunpack.c.0.s8 %v247
    %v249 = vperm.slane %v243, %v248
    %v251 = vunpack.c.l.s4 1934713408
    %v252 = vunpack.c.0.s8 %v251
    %v253 = vperm.slane %v245, %v252
    %v254 = vrot.slane %v249, 4
    %v255 = vsel %vm152, %v254, %v237
    %v256 = vrot.slane %v237, 4
    %v257 = vsel %vm152, %v249, %v256
    %v258 = vrot.slane %v253, 4
    %v259 = vsel %vm152, %v258, %v241
    %v260 = vrot.slane %v241, 4
    %v261 = vsel %vm152, %v253, %v260
    %262 = vrot.lane.b32.xlu0 %v130, 96
    %v263 = vpop.permute.xlu0 %262
    %264 = vrot.lane.b32.xlu0 %v143, 96
    %v265 = vpop.permute.xlu0 %264
    %266 = vrot.lane.b32.xlu0 %v146, 96
    %v267 = vpop.permute.xlu0 %266
    %268 = vrot.lane.b32.xlu0 %v149, 96
    %v269 = vpop.permute.xlu0 %268
    %v274 = vrot.slane %v267, 4
    %v275 = vsel %vm152, %v274, %v263
    %v276 = vrot.slane %v263, 4
    %v277 = vsel %vm152, %v267, %v276
    %v279 = vunpack.c.l.s4 1983009808
    %v280 = vunpack.c.0.s8 %v279
    %v281 = vperm.slane %v275, %v280
    %v283 = vunpack.c.l.s4 1983009808
    %v284 = vunpack.c.0.s8 %v283
    %v285 = vperm.slane %v277, %v284
    %v286 = vrot.slane %v269, 4
    %v287 = vsel %vm152, %v286, %v265
    %v288 = vrot.slane %v265, 4
    %v289 = vsel %vm152, %v269, %v288
    %v291 = vunpack.c.l.s4 1983009808
    %v292 = vunpack.c.0.s8 %v291
    %v293 = vperm.slane %v287, %v292
    %v295 = vunpack.c.l.s4 1983009808
    %v296 = vunpack.c.0.s8 %v295
    %v297 = vperm.slane %v289, %v296
    %v298 = vrot.slane %v293, 4
    %v299 = vsel %vm152, %v298, %v281
    %v300 = vrot.slane %v281, 4
    %v301 = vsel %vm152, %v293, %v300
    %v303 = vunpack.c.l.s4 1934713408
    %v304 = vunpack.c.0.s8 %v303
    %v305 = vperm.slane %v299, %v304
    %v307 = vunpack.c.l.s4 1934713408
    %v308 = vunpack.c.0.s8 %v307
    %v309 = vperm.slane %v301, %v308
    %v310 = vrot.slane %v297, 4
    %v311 = vsel %vm152, %v310, %v285
    %v312 = vrot.slane %v285, 4
    %v313 = vsel %vm152, %v297, %v312
    %v315 = vunpack.c.l.s4 1934713408
    %v316 = vunpack.c.0.s8 %v315
    %v317 = vperm.slane %v311, %v316
    %v319 = vunpack.c.l.s4 1934713408
    %v320 = vunpack.c.0.s8 %v319
    %v321 = vperm.slane %v313, %v320
    %v322 = vrot.slane %v305, 4
    %v323 = vsel %vm152, 0.0, %v322
    %v324 = vrot.slane %v309, 4
    %v325 = vsel %vm152, 0.0, %v324
    %v326 = vrot.slane %v317, 4
    %v327 = vsel %vm152, 0.0, %v326
    %v328 = vrot.slane %v321, 4
    %v329 = vsel %vm152, 0.0, %v328
    %v330 = vsel %vm152, %v324, %v305
    %v332 = vunpack.c.l.s4 1983009808
    %v333 = vunpack.c.0.s8 %v332
    %v334 = vperm.slane %v330, %v333
    %v335 = vrot.slane %v325, 4
    %v336 = vsel %vm152, %v335, %v323
    %v338 = vunpack.c.l.s4 1983009808
    %v339 = vunpack.c.0.s8 %v338
    %v340 = vperm.slane %v336, %v339
    %v341 = vsel %vm152, %v328, %v317
    %v343 = vunpack.c.l.s4 1983009808
    %v344 = vunpack.c.0.s8 %v343
    %v345 = vperm.slane %v341, %v344
    %v346 = vrot.slane %v329, 4
    %v347 = vsel %vm152, %v346, %v327
    %v349 = vunpack.c.l.s4 1983009808
    %v350 = vunpack.c.0.s8 %v349
    %v351 = vperm.slane %v347, %v350
    %v352 = vrot.slane %v340, 4
    %v353 = vsel %vm152, %v352, %v334
    %v354 = vrot.slane %v334, 4
    %v355 = vsel %vm152, %v340, %v354
    %v357 = vunpack.c.l.s4 1934713408
    %v358 = vunpack.c.0.s8 %v357
    %v359 = vperm.slane %v353, %v358
    %v361 = vunpack.c.l.s4 1934713408
    %v362 = vunpack.c.0.s8 %v361
    %v363 = vperm.slane %v355, %v362
    %v364 = vrot.slane %v351, 4
    %v365 = vsel %vm152, %v364, %v345
    %v366 = vrot.slane %v345, 4
    %v367 = vsel %vm152, %v351, %v366
    %v369 = vunpack.c.l.s4 1934713408
    %v370 = vunpack.c.0.s8 %v369
    %v371 = vperm.slane %v365, %v370
    %v373 = vunpack.c.l.s4 1934713408
    %v374 = vunpack.c.0.s8 %v373
    %v375 = vperm.slane %v367, %v374
    %v376 = vrot.slane %v371, 4
    %v377 = vsel %vm152, %v376, %v359
    %v378 = vrot.slane %v359, 4
    %v379 = vsel %vm152, %v371, %v378
    %v380 = vrot.slane %v375, 4
    %v381 = vsel %vm152, %v380, %v363
    %v382 = vrot.slane %v363, 4
    %v383 = vsel %vm152, %v375, %v382
    %384 = vrot.lane.b32.xlu0 %v130, 64
    %v385 = vpop.permute.xlu0 %384
    %386 = vrot.lane.b32.xlu0 %v143, 64
    %v387 = vpop.permute.xlu0 %386
    %388 = vrot.lane.b32.xlu0 %v146, 64
    %v389 = vpop.permute.xlu0 %388
    %390 = vrot.lane.b32.xlu0 %v149, 64
    %v391 = vpop.permute.xlu0 %390
    %v396 = vrot.slane %v389, 4
    %v397 = vsel %vm152, %v396, %v385
    %v398 = vrot.slane %v385, 4
    %v399 = vsel %vm152, %v389, %v398
    %v401 = vunpack.c.l.s4 1983009808
    %v402 = vunpack.c.0.s8 %v401
    %v403 = vperm.slane %v397, %v402
    %v405 = vunpack.c.l.s4 1983009808
    %v406 = vunpack.c.0.s8 %v405
    %v407 = vperm.slane %v399, %v406
    %v408 = vrot.slane %v391, 4
    %v409 = vsel %vm152, %v408, %v387
    %v410 = vrot.slane %v387, 4
    %v411 = vsel %vm152, %v391, %v410
    %v413 = vunpack.c.l.s4 1983009808
    %v414 = vunpack.c.0.s8 %v413
    %v415 = vperm.slane %v409, %v414
    %v417 = vunpack.c.l.s4 1983009808
    %v418 = vunpack.c.0.s8 %v417
    %v419 = vperm.slane %v411, %v418
    %v420 = vrot.slane %v415, 4
    %v421 = vsel %vm152, %v420, %v403
    %v422 = vrot.slane %v403, 4
    %v423 = vsel %vm152, %v415, %v422
    %v425 = vunpack.c.l.s4 1934713408
    %v426 = vunpack.c.0.s8 %v425
    %v427 = vperm.slane %v421, %v426
    %v429 = vunpack.c.l.s4 1934713408
    %v430 = vunpack.c.0.s8 %v429
    %v431 = vperm.slane %v423, %v430
    %v432 = vrot.slane %v419, 4
    %v433 = vsel %vm152, %v432, %v407
    %v434 = vrot.slane %v407, 4
    %v435 = vsel %vm152, %v419, %v434
    %v437 = vunpack.c.l.s4 1934713408
    %v438 = vunpack.c.0.s8 %v437
    %v439 = vperm.slane %v433, %v438
    %v441 = vunpack.c.l.s4 1934713408
    %v442 = vunpack.c.0.s8 %v441
    %v443 = vperm.slane %v435, %v442
    %v444 = vrot.slane %v427, 4
    %v445 = vsel %vm152, 0.0, %v444
    %v446 = vrot.slane %v431, 4
    %v447 = vsel %vm152, 0.0, %v446
    %v448 = vrot.slane %v439, 4
    %v449 = vsel %vm152, 0.0, %v448
    %v450 = vrot.slane %v443, 4
    %v451 = vsel %vm152, 0.0, %v450
    %v452 = vsel %vm152, %v446, %v427
    %v454 = vunpack.c.l.s4 1983009808
    %v455 = vunpack.c.0.s8 %v454
    %v456 = vperm.slane %v452, %v455
    %v457 = vrot.slane %v447, 4
    %v458 = vsel %vm152, %v457, %v445
    %v460 = vunpack.c.l.s4 1983009808
    %v461 = vunpack.c.0.s8 %v460
    %v462 = vperm.slane %v458, %v461
    %v463 = vsel %vm152, %v450, %v439
    %v465 = vunpack.c.l.s4 1983009808
    %v466 = vunpack.c.0.s8 %v465
    %v467 = vperm.slane %v463, %v466
    %v468 = vrot.slane %v451, 4
    %v469 = vsel %vm152, %v468, %v449
    %v471 = vunpack.c.l.s4 1983009808
    %v472 = vunpack.c.0.s8 %v471
    %v473 = vperm.slane %v469, %v472
    %v474 = vrot.slane %v462, 4
    %v475 = vsel %vm152, %v474, %v456
    %v476 = vrot.slane %v456, 4
    %v477 = vsel %vm152, %v462, %v476
    %v479 = vunpack.c.l.s4 1934713408
    %v480 = vunpack.c.0.s8 %v479
    %v481 = vperm.slane %v475, %v480
    %v483 = vunpack.c.l.s4 1934713408
    %v484 = vunpack.c.0.s8 %v483
    %v485 = vperm.slane %v477, %v484
    %v486 = vrot.slane %v473, 4
    %v487 = vsel %vm152, %v486, %v467
    %v488 = vrot.slane %v467, 4
    %v489 = vsel %vm152, %v473, %v488
    %v491 = vunpack.c.l.s4 1934713408
    %v492 = vunpack.c.0.s8 %v491
    %v493 = vperm.slane %v487, %v492
    %v495 = vunpack.c.l.s4 1934713408
    %v496 = vunpack.c.0.s8 %v495
    %v497 = vperm.slane %v489, %v496
    %v498 = vrot.slane %v493, 4
    %v499 = vsel %vm152, %v498, %v481
    %v500 = vrot.slane %v481, 4
    %v501 = vsel %vm152, %v493, %v500
    %v502 = vrot.slane %v497, 4
    %v503 = vsel %vm152, %v502, %v485
    %v504 = vrot.slane %v485, 4
    %v505 = vsel %vm152, %v497, %v504
    %v507 = vperm.slane %v139, 0
    %vm509 = vcmask 64512
    %v511 = vsel %vm509, %v255, 0
    %v514 = vsel %vm509, %v377, 0
    %516 = vmatpush.xpose.msra.mxu0 0.0
    %517 = vmatpush.xpose.msra.mxu0 0.0
    %518 = vmatpush.xpose.msra.mxu0 0.0
    %519 = vmatpush.xpose.msra.mxu0 0.0
    %520 = vmatpush.xpose.msra.mxu0 0.0
    %521 = vmatpush.xpose.msra.mxu0 0.0
    %522 = vmatpush.xpose.msra.mxu0 0.0
    %523 = vmatpush.xpose.msra.mxu0 0.0
    %524 = vmatpush.xpose.msra.mxu0 0.0
    %525 = vmatpush.xpose.msra.mxu0 0.0
    %526 = vmatpush.xpose.msra.mxu0 0.0
    %527 = vmatpush.xpose.msra.mxu0 0.0
    %528 = vmatpush.xpose.msra.mxu0 0.0
    %529 = vmatpush.xpose.msra.mxu0 0.0
    %530 = vmatpush.xpose.msra.mxu0 0.0
    %531 = vmatpush.xpose.msra.mxu0 %v514
    %532 = vmatmul.f32.gmra.mxu0 %v511
    %v533 = vpop.f32.mrf.mxu0
    %v534 = vadd.f32 %v507, %v533
    %535 = vdwg.mxu0
    %v537 = vsel %vm509, %v257, 0
    %v540 = vsel %vm509, %v379, 0
    %542 = vmatpush.xpose.msra.mxu0 0.0
    %543 = vmatpush.xpose.msra.mxu0 0.0
    %544 = vmatpush.xpose.msra.mxu0 0.0
    %545 = vmatpush.xpose.msra.mxu0 0.0
    %546 = vmatpush.xpose.msra.mxu0 0.0
    %547 = vmatpush.xpose.msra.mxu0 0.0
    %548 = vmatpush.xpose.msra.mxu0 0.0
    %549 = vmatpush.xpose.msra.mxu0 0.0
    %550 = vmatpush.xpose.msra.mxu0 0.0
    %551 = vmatpush.xpose.msra.mxu0 0.0
    %552 = vmatpush.xpose.msra.mxu0 0.0
    %553 = vmatpush.xpose.msra.mxu0 0.0
    %554 = vmatpush.xpose.msra.mxu0 0.0
    %555 = vmatpush.xpose.msra.mxu0 0.0
    %556 = vmatpush.xpose.msra.mxu0 0.0
    %557 = vmatpush.xpose.msra.mxu0 %v540
    %558 = vmatmul.f32.gmra.mxu0 %v537
    %v559 = vpop.f32.mrf.mxu0
    %v560 = vadd.f32 %v507, %v559
    %561 = vdwg.mxu0
    %v563 = vsel %vm509, %v259, 0
    %v566 = vsel %vm509, %v381, 0
    %568 = vmatpush.xpose.msra.mxu0 0.0
    %569 = vmatpush.xpose.msra.mxu0 0.0
    %570 = vmatpush.xpose.msra.mxu0 0.0
    %571 = vmatpush.xpose.msra.mxu0 0.0
    %572 = vmatpush.xpose.msra.mxu0 0.0
    %573 = vmatpush.xpose.msra.mxu0 0.0
    %574 = vmatpush.xpose.msra.mxu0 0.0
    %575 = vmatpush.xpose.msra.mxu0 0.0
    %576 = vmatpush.xpose.msra.mxu0 0.0
    %577 = vmatpush.xpose.msra.mxu0 0.0
    %578 = vmatpush.xpose.msra.mxu0 0.0
    %579 = vmatpush.xpose.msra.mxu0 0.0
    %580 = vmatpush.xpose.msra.mxu0 0.0
    %581 = vmatpush.xpose.msra.mxu0 0.0
    %582 = vmatpush.xpose.msra.mxu0 0.0
    %583 = vmatpush.xpose.msra.mxu0 %v566
    %584 = vmatmul.f32.gmra.mxu0 %v563
    %v585 = vpop.f32.mrf.mxu0
    %v586 = vadd.f32 %v507, %v585
    %587 = vdwg.mxu0
    %v589 = vsel %vm509, %v261, 0
    %v592 = vsel %vm509, %v383, 0
    %594 = vmatpush.xpose.msra.mxu0 0.0
    %595 = vmatpush.xpose.msra.mxu0 0.0
    %596 = vmatpush.xpose.msra.mxu0 0.0
    %597 = vmatpush.xpose.msra.mxu0 0.0
    %598 = vmatpush.xpose.msra.mxu0 0.0
    %599 = vmatpush.xpose.msra.mxu0 0.0
    %600 = vmatpush.xpose.msra.mxu0 0.0
    %601 = vmatpush.xpose.msra.mxu0 0.0
    %602 = vmatpush.xpose.msra.mxu0 0.0
    %603 = vmatpush.xpose.msra.mxu0 0.0
    %604 = vmatpush.xpose.msra.mxu0 0.0
    %605 = vmatpush.xpose.msra.mxu0 0.0
    %606 = vmatpush.xpose.msra.mxu0 0.0
    %607 = vmatpush.xpose.msra.mxu0 0.0
    %608 = vmatpush.xpose.msra.mxu0 0.0
    %609 = vmatpush.xpose.msra.mxu0 %v592
    %610 = vmatmul.f32.gmra.mxu0 %v589
    %v611 = vpop.f32.mrf.mxu0
    %v612 = vadd.f32 %v507, %v611
    %613 = vdwg.mxu0
    %v614 = vsel %vm509, %v534, -inf
    %615 = vmax.xlane.f32.xlu0 %v614
    %v616 = vpop.xlane.xlu0 %615
    %v617 = vsel %vm509, %v560, -inf
    %618 = vmax.xlane.f32.xlu0 %v617
    %v619 = vpop.xlane.xlu0 %618
    %v620 = vsel %vm509, %v586, -inf
    %621 = vmax.xlane.f32.xlu0 %v620
    %v622 = vpop.xlane.xlu0 %621
    %v623 = vsel %vm509, %v612, -inf
    %624 = vmax.xlane.f32.xlu0 %v623
    %v625 = vpop.xlane.xlu0 %624
    %v626 = vsub.f32 %v534, %v616
    %v627 = vsub.f32 %v560, %v619
    %v628 = vsub.f32 %v586, %v622
    %v629 = vsub.f32 %v612, %v625
    %v630 = vmul.f32 %v626, 1.442695
    %v631 = vpow.pop %v630
    %v632 = vmul.f32 %v627, 1.442695
    %v633 = vpow.pop %v632
    %v634 = vmul.f32 %v628, 1.442695
    %v635 = vpow.pop %v634
    %v636 = vmul.f32 %v629, 1.442695
    %v637 = vpow.pop %v636
    %v638 = vsel %vm509, %v631, 0.0
    %639 = vadd.xlane.f32.xlu0 %v638
    %v640 = vpop.xlane.xlu0 %639
    %v641 = vsel %vm509, %v633, 0.0
    %642 = vadd.xlane.f32.xlu0 %v641
    %v643 = vpop.xlane.xlu0 %642
    %v644 = vsel %vm509, %v635, 0.0
    %645 = vadd.xlane.f32.xlu0 %v644
    %v646 = vpop.xlane.xlu0 %645
    %v647 = vsel %vm509, %v637, 0.0
    %648 = vadd.xlane.f32.xlu0 %v647
    %v649 = vpop.xlane.xlu0 %648
    %v650 = vrcp.pop %v640
    %v651 = vrcp.pop %v643
    %v652 = vrcp.pop %v646
    %v653 = vrcp.pop %v649
    %v654 = vmul.f32 %v631, %v650
    %v655 = vmul.f32 %v633, %v651
    %v656 = vmul.f32 %v635, %v652
    %v657 = vmul.f32 %v637, %v653
    %v659 = vsel %vm509, %v654, 0
    %661 = vmatpush.msra.mxu0 0.0
    %662 = vmatpush.msra.mxu0 0.0
    %663 = vmatpush.msra.mxu0 0.0
    %664 = vmatpush.msra.mxu0 0.0
    %665 = vmatpush.msra.mxu0 0.0
    %666 = vmatpush.msra.mxu0 0.0
    %667 = vmatpush.msra.mxu0 0.0
    %668 = vmatpush.msra.mxu0 0.0
    %669 = vmatpush.msra.mxu0 0.0
    %670 = vmatpush.msra.mxu0 0.0
    %671 = vmatpush.msra.mxu0 0.0
    %672 = vmatpush.msra.mxu0 0.0
    %673 = vmatpush.msra.mxu0 0.0
    %674 = vmatpush.msra.mxu0 0.0
    %675 = vmatpush.msra.mxu0 0.0
    %676 = vmatpush.msra.mxu0 %v499
    %677 = vmatmul.f32.gmra.mxu0 %v659
    %v678 = vpop.f32.mrf.mxu0
    %v679 = vadd.f32 0.0, %v678
    %680 = vdwg.mxu0
    %v682 = vsel %vm509, %v655, 0
    %684 = vmatpush.msra.mxu0 0.0
    %685 = vmatpush.msra.mxu0 0.0
    %686 = vmatpush.msra.mxu0 0.0
    %687 = vmatpush.msra.mxu0 0.0
    %688 = vmatpush.msra.mxu0 0.0
    %689 = vmatpush.msra.mxu0 0.0
    %690 = vmatpush.msra.mxu0 0.0
    %691 = vmatpush.msra.mxu0 0.0
    %692 = vmatpush.msra.mxu0 0.0
    %693 = vmatpush.msra.mxu0 0.0
    %694 = vmatpush.msra.mxu0 0.0
    %695 = vmatpush.msra.mxu0 0.0
    %696 = vmatpush.msra.mxu0 0.0
    %697 = vmatpush.msra.mxu0 0.0
    %698 = vmatpush.msra.mxu0 0.0
    %699 = vmatpush.msra.mxu0 %v501
    %700 = vmatmul.f32.gmra.mxu0 %v682
    %v701 = vpop.f32.mrf.mxu0
    %v702 = vadd.f32 0.0, %v701
    %703 = vdwg.mxu0
    %v705 = vsel %vm509, %v656, 0
    %707 = vmatpush.msra.mxu0 0.0
    %708 = vmatpush.msra.mxu0 0.0
    %709 = vmatpush.msra.mxu0 0.0
    %710 = vmatpush.msra.mxu0 0.0
    %711 = vmatpush.msra.mxu0 0.0
    %712 = vmatpush.msra.mxu0 0.0
    %713 = vmatpush.msra.mxu0 0.0
    %714 = vmatpush.msra.mxu0 0.0
    %715 = vmatpush.msra.mxu0 0.0
    %716 = vmatpush.msra.mxu0 0.0
    %717 = vmatpush.msra.mxu0 0.0
    %718 = vmatpush.msra.mxu0 0.0
    %719 = vmatpush.msra.mxu0 0.0
    %720 = vmatpush.msra.mxu0 0.0
    %721 = vmatpush.msra.mxu0 0.0
    %722 = vmatpush.msra.mxu0 %v503
    %723 = vmatmul.f32.gmra.mxu0 %v705
    %v724 = vpop.f32.mrf.mxu0
    %v725 = vadd.f32 0.0, %v724
    %726 = vdwg.mxu0
    %v728 = vsel %vm509, %v657, 0
    %730 = vmatpush.msra.mxu0 0.0
    %731 = vmatpush.msra.mxu0 0.0
    %732 = vmatpush.msra.mxu0 0.0
    %733 = vmatpush.msra.mxu0 0.0
    %734 = vmatpush.msra.mxu0 0.0
    %735 = vmatpush.msra.mxu0 0.0
    %736 = vmatpush.msra.mxu0 0.0
    %737 = vmatpush.msra.mxu0 0.0
    %738 = vmatpush.msra.mxu0 0.0
    %739 = vmatpush.msra.mxu0 0.0
    %740 = vmatpush.msra.mxu0 0.0
    %741 = vmatpush.msra.mxu0 0.0
    %742 = vmatpush.msra.mxu0 0.0
    %743 = vmatpush.msra.mxu0 0.0
    %744 = vmatpush.msra.mxu0 0.0
    %745 = vmatpush.msra.mxu0 %v505
    %746 = vmatmul.f32.gmra.mxu0 %v728
    %v747 = vpop.f32.mrf.mxu0
    %v748 = vadd.f32 0.0, %v747
    %749 = vdwg.mxu0
    %v750 = vrot.slane %v725, 4
    %v751 = vsel %vm152, %v750, %v679
    %v752 = vrot.slane %v679, 4
    %v753 = vsel %vm152, %v725, %v752
    %v755 = vunpack.c.l.s4 1983009808
    %v756 = vunpack.c.0.s8 %v755
    %v757 = vperm.slane %v751, %v756
    %v759 = vunpack.c.l.s4 1983009808
    %v760 = vunpack.c.0.s8 %v759
    %v761 = vperm.slane %v753, %v760
    %v762 = vrot.slane %v748, 4
    %v763 = vsel %vm152, %v762, %v702
    %v764 = vrot.slane %v702, 4
    %v765 = vsel %vm152, %v748, %v764
    %v767 = vunpack.c.l.s4 1983009808
    %v768 = vunpack.c.0.s8 %v767
    %v769 = vperm.slane %v763, %v768
    %v771 = vunpack.c.l.s4 1983009808
    %v772 = vunpack.c.0.s8 %v771
    %v773 = vperm.slane %v765, %v772
    %v774 = vrot.slane %v769, 4
    %v775 = vsel %vm152, %v774, %v757
    %v776 = vrot.slane %v757, 4
    %v777 = vsel %vm152, %v769, %v776
    %v779 = vunpack.c.l.s4 1934713408
    %v780 = vunpack.c.0.s8 %v779
    %v781 = vperm.slane %v775, %v780
    %v783 = vunpack.c.l.s4 1934713408
    %v784 = vunpack.c.0.s8 %v783
    %v785 = vperm.slane %v777, %v784
    %v786 = vrot.slane %v773, 4
    %v787 = vsel %vm152, %v786, %v761
    %v788 = vrot.slane %v761, 4
    %v789 = vsel %vm152, %v773, %v788
    %v791 = vunpack.c.l.s4 1934713408
    %v792 = vunpack.c.0.s8 %v791
    %v793 = vperm.slane %v787, %v792
    %v795 = vunpack.c.l.s4 1934713408
    %v796 = vunpack.c.0.s8 %v795
    %v797 = vperm.slane %v789, %v796
    %v798 = vrot.slane %v781, 4
    %v799 = vsel %vm152, 0.0, %v798
    %v800 = vrot.slane %v785, 4
    %v801 = vsel %vm152, 0.0, %v800
    %v802 = vrot.slane %v793, 4
    %v803 = vsel %vm152, 0.0, %v802
    %v804 = vrot.slane %v797, 4
    %v805 = vsel %vm152, 0.0, %v804
    %v806 = vsel %vm152, %v800, %v781
    %v808 = vunpack.c.l.s4 1983009808
    %v809 = vunpack.c.0.s8 %v808
    %v810 = vperm.slane %v806, %v809
    %v811 = vrot.slane %v801, 4
    %v812 = vsel %vm152, %v811, %v799
    %v814 = vunpack.c.l.s4 1983009808
    %v815 = vunpack.c.0.s8 %v814
    %v816 = vperm.slane %v812, %v815
    %v817 = vsel %vm152, %v804, %v793
    %v819 = vunpack.c.l.s4 1983009808
    %v820 = vunpack.c.0.s8 %v819
    %v821 = vperm.slane %v817, %v820
    %v822 = vrot.slane %v805, 4
    %v823 = vsel %vm152, %v822, %v803
    %v825 = vunpack.c.l.s4 1983009808
    %v826 = vunpack.c.0.s8 %v825
    %v827 = vperm.slane %v823, %v826
    %v828 = vrot.slane %v816, 4
    %v829 = vsel %vm152, %v828, %v810
    %v830 = vrot.slane %v810, 4
    %v831 = vsel %vm152, %v816, %v830
    %v833 = vunpack.c.l.s4 1934713408
    %v834 = vunpack.c.0.s8 %v833
    %v835 = vperm.slane %v829, %v834
    %v837 = vunpack.c.l.s4 1934713408
    %v838 = vunpack.c.0.s8 %v837
    %v839 = vperm.slane %v831, %v838
    %v840 = vrot.slane %v827, 4
    %v841 = vsel %vm152, %v840, %v821
    %v842 = vrot.slane %v821, 4
    %v843 = vsel %vm152, %v827, %v842
    %v845 = vunpack.c.l.s4 1934713408
    %v846 = vunpack.c.0.s8 %v845
    %v847 = vperm.slane %v841, %v846
    %v849 = vunpack.c.l.s4 1934713408
    %v850 = vunpack.c.0.s8 %v849
    %v851 = vperm.slane %v843, %v850
    %v852 = vrot.slane %v847, 4
    %v853 = vsel %vm152, %v852, %v835
    %v854 = vrot.slane %v835, 4
    %v855 = vsel %vm152, %v847, %v854
    %v856 = vrot.slane %v851, 4
    %v857 = vsel %vm152, %v856, %v839
    %v858 = vrot.slane %v839, 4
    %v859 = vsel %vm152, %v851, %v858
    %861 = vrot.lane.b32.xlu0 %v855, 8
    %v862 = vpop.permute.xlu0 %861
    %865 = vrot.lane.b32.xlu0 %v857, 16
    %v866 = vpop.permute.xlu0 %865
    %869 = vrot.lane.b32.xlu0 %v859, 24
    %v870 = vpop.permute.xlu0 %869
    %v872 = vsel %vm509, %v853, %v862
    %vm873 = vcmask 130048
    %v874 = vsel %vm873, %v872, %v866
    %vm875 = vcmask 195584
    %v876 = vsel %vm875, %v874, %v870
    %878 = vrot.lane.b32.xlu0 %v133, 120
    %v879 = vpop.permute.xlu0 %878
    %881 = vrot.lane.b32.xlu0 %v133, 112
    %v882 = vpop.permute.xlu0 %881
    %884 = vrot.lane.b32.xlu0 %v133, 104
    %v885 = vpop.permute.xlu0 %884
    %v887 = vrot.slane %v882, 4
    %v888 = vsel %vm152, %v887, %v133
    %v889 = vrot.slane %v133, 4
    %v890 = vsel %vm152, %v882, %v889
    %v892 = vunpack.c.l.s4 1983009808
    %v893 = vunpack.c.0.s8 %v892
    %v894 = vperm.slane %v888, %v893
    %v896 = vunpack.c.l.s4 1983009808
    %v897 = vunpack.c.0.s8 %v896
    %v898 = vperm.slane %v890, %v897
    %v899 = vrot.slane %v885, 4
    %v900 = vsel %vm152, %v899, %v879
    %v901 = vrot.slane %v879, 4
    %v902 = vsel %vm152, %v885, %v901
    %v904 = vunpack.c.l.s4 1983009808
    %v905 = vunpack.c.0.s8 %v904
    %v906 = vperm.slane %v900, %v905
    %v908 = vunpack.c.l.s4 1983009808
    %v909 = vunpack.c.0.s8 %v908
    %v910 = vperm.slane %v902, %v909
    %v911 = vrot.slane %v906, 4
    %v912 = vsel %vm152, %v911, %v894
    %v913 = vrot.slane %v894, 4
    %v914 = vsel %vm152, %v906, %v913
    %v916 = vunpack.c.l.s4 1934713408
    %v917 = vunpack.c.0.s8 %v916
    %v918 = vperm.slane %v912, %v917
    %v920 = vunpack.c.l.s4 1934713408
    %v921 = vunpack.c.0.s8 %v920
    %v922 = vperm.slane %v914, %v921
    %v923 = vrot.slane %v910, 4
    %v924 = vsel %vm152, %v923, %v898
    %v925 = vrot.slane %v898, 4
    %v926 = vsel %vm152, %v910, %v925
    %v928 = vunpack.c.l.s4 1934713408
    %v929 = vunpack.c.0.s8 %v928
    %v930 = vperm.slane %v924, %v929
    %v932 = vunpack.c.l.s4 1934713408
    %v933 = vunpack.c.0.s8 %v932
    %v934 = vperm.slane %v926, %v933
    %v935 = vrot.slane %v918, 4
    %v936 = vsel %vm152, 0.0, %v935
    %v937 = vrot.slane %v922, 4
    %v938 = vsel %vm152, 0.0, %v937
    %v939 = vrot.slane %v930, 4
    %v940 = vsel %vm152, 0.0, %v939
    %v941 = vrot.slane %v934, 4
    %v942 = vsel %vm152, 0.0, %v941
    %v943 = vsel %vm152, %v937, %v918
    %v945 = vunpack.c.l.s4 1983009808
    %v946 = vunpack.c.0.s8 %v945
    %v947 = vperm.slane %v943, %v946
    %v948 = vrot.slane %v938, 4
    %v949 = vsel %vm152, %v948, %v936
    %v951 = vunpack.c.l.s4 1983009808
    %v952 = vunpack.c.0.s8 %v951
    %v953 = vperm.slane %v949, %v952
    %v954 = vsel %vm152, %v941, %v930
    %v956 = vunpack.c.l.s4 1983009808
    %v957 = vunpack.c.0.s8 %v956
    %v958 = vperm.slane %v954, %v957
    %v959 = vrot.slane %v942, 4
    %v960 = vsel %vm152, %v959, %v940
    %v962 = vunpack.c.l.s4 1983009808
    %v963 = vunpack.c.0.s8 %v962
    %v964 = vperm.slane %v960, %v963
    %v965 = vrot.slane %v953, 4
    %v966 = vsel %vm152, %v965, %v947
    %v967 = vrot.slane %v947, 4
    %v968 = vsel %vm152, %v953, %v967
    %v970 = vunpack.c.l.s4 1934713408
    %v971 = vunpack.c.0.s8 %v970
    %v972 = vperm.slane %v966, %v971
    %v974 = vunpack.c.l.s4 1934713408
    %v975 = vunpack.c.0.s8 %v974
    %v976 = vperm.slane %v968, %v975
    %v977 = vrot.slane %v964, 4
    %v978 = vsel %vm152, %v977, %v958
    %v979 = vrot.slane %v958, 4
    %v980 = vsel %vm152, %v964, %v979
    %v982 = vunpack.c.l.s4 1934713408
    %v983 = vunpack.c.0.s8 %v982
    %v984 = vperm.slane %v978, %v983
    %v986 = vunpack.c.l.s4 1934713408
    %v987 = vunpack.c.0.s8 %v986
    %v988 = vperm.slane %v980, %v987
    %v989 = vrot.slane %v984, 4
    %v990 = vsel %vm152, %v989, %v972
    %v991 = vrot.slane %v972, 4
    %v992 = vsel %vm152, %v984, %v991
    %v993 = vrot.slane %v988, 4
    %v994 = vsel %vm152, %v993, %v976
    %v995 = vrot.slane %v976, 4
    %v996 = vsel %vm152, %v988, %v995
    %997 = vrot.lane.b32.xlu0 %v133, 96
    %v998 = vpop.permute.xlu0 %997
    %999 = vrot.lane.b32.xlu0 %v879, 96
    %v1000 = vpop.permute.xlu0 %999
    %1001 = vrot.lane.b32.xlu0 %v882, 96
    %v1002 = vpop.permute.xlu0 %1001
    %1003 = vrot.lane.b32.xlu0 %v885, 96
    %v1004 = vpop.permute.xlu0 %1003
    %v1009 = vrot.slane %v1002, 4
    %v1010 = vsel %vm152, %v1009, %v998
    %v1011 = vrot.slane %v998, 4
    %v1012 = vsel %vm152, %v1002, %v1011
    %v1014 = vunpack.c.l.s4 1983009808
    %v1015 = vunpack.c.0.s8 %v1014
    %v1016 = vperm.slane %v1010, %v1015
    %v1018 = vunpack.c.l.s4 1983009808
    %v1019 = vunpack.c.0.s8 %v1018
    %v1020 = vperm.slane %v1012, %v1019
    %v1021 = vrot.slane %v1004, 4
    %v1022 = vsel %vm152, %v1021, %v1000
    %v1023 = vrot.slane %v1000, 4
    %v1024 = vsel %vm152, %v1004, %v1023
    %v1026 = vunpack.c.l.s4 1983009808
    %v1027 = vunpack.c.0.s8 %v1026
    %v1028 = vperm.slane %v1022, %v1027
    %v1030 = vunpack.c.l.s4 1983009808
    %v1031 = vunpack.c.0.s8 %v1030
    %v1032 = vperm.slane %v1024, %v1031
    %v1033 = vrot.slane %v1028, 4
    %v1034 = vsel %vm152, %v1033, %v1016
    %v1035 = vrot.slane %v1016, 4
    %v1036 = vsel %vm152, %v1028, %v1035
    %v1038 = vunpack.c.l.s4 1934713408
    %v1039 = vunpack.c.0.s8 %v1038
    %v1040 = vperm.slane %v1034, %v1039
    %v1042 = vunpack.c.l.s4 1934713408
    %v1043 = vunpack.c.0.s8 %v1042
    %v1044 = vperm.slane %v1036, %v1043
    %v1045 = vrot.slane %v1032, 4
    %v1046 = vsel %vm152, %v1045, %v1020
    %v1047 = vrot.slane %v1020, 4
    %v1048 = vsel %vm152, %v1032, %v1047
    %v1050 = vunpack.c.l.s4 1934713408
    %v1051 = vunpack.c.0.s8 %v1050
    %v1052 = vperm.slane %v1046, %v1051
    %v1054 = vunpack.c.l.s4 1934713408
    %v1055 = vunpack.c.0.s8 %v1054
    %v1056 = vperm.slane %v1048, %v1055
    %v1057 = vrot.slane %v1040, 4
    %v1058 = vsel %vm152, 0.0, %v1057
    %v1059 = vrot.slane %v1044, 4
    %v1060 = vsel %vm152, 0.0, %v1059
    %v1061 = vrot.slane %v1052, 4
    %v1062 = vsel %vm152, 0.0, %v1061
    %v1063 = vrot.slane %v1056, 4
    %v1064 = vsel %vm152, 0.0, %v1063
    %v1065 = vsel %vm152, %v1059, %v1040
    %v1067 = vunpack.c.l.s4 1983009808
    %v1068 = vunpack.c.0.s8 %v1067
    %v1069 = vperm.slane %v1065, %v1068
    %v1070 = vrot.slane %v1060, 4
    %v1071 = vsel %vm152, %v1070, %v1058
    %v1073 = vunpack.c.l.s4 1983009808
    %v1074 = vunpack.c.0.s8 %v1073
    %v1075 = vperm.slane %v1071, %v1074
    %v1076 = vsel %vm152, %v1063, %v1052
    %v1078 = vunpack.c.l.s4 1983009808
    %v1079 = vunpack.c.0.s8 %v1078
    %v1080 = vperm.slane %v1076, %v1079
    %v1081 = vrot.slane %v1064, 4
    %v1082 = vsel %vm152, %v1081, %v1062
    %v1084 = vunpack.c.l.s4 1983009808
    %v1085 = vunpack.c.0.s8 %v1084
    %v1086 = vperm.slane %v1082, %v1085
    %v1087 = vrot.slane %v1075, 4
    %v1088 = vsel %vm152, %v1087, %v1069
    %v1089 = vrot.slane %v1069, 4
    %v1090 = vsel %vm152, %v1075, %v1089
    %v1092 = vunpack.c.l.s4 1934713408
    %v1093 = vunpack.c.0.s8 %v1092
    %v1094 = vperm.slane %v1088, %v1093
    %v1096 = vunpack.c.l.s4 1934713408
    %v1097 = vunpack.c.0.s8 %v1096
    %v1098 = vperm.slane %v1090, %v1097
    %v1099 = vrot.slane %v1086, 4
    %v1100 = vsel %vm152, %v1099, %v1080
    %v1101 = vrot.slane %v1080, 4
    %v1102 = vsel %vm152, %v1086, %v1101
    %v1104 = vunpack.c.l.s4 1934713408
    %v1105 = vunpack.c.0.s8 %v1104
    %v1106 = vperm.slane %v1100, %v1105
    %v1108 = vunpack.c.l.s4 1934713408
    %v1109 = vunpack.c.0.s8 %v1108
    %v1110 = vperm.slane %v1102, %v1109
    %v1111 = vrot.slane %v1106, 4
    %v1112 = vsel %vm152, %v1111, %v1094
    %v1113 = vrot.slane %v1094, 4
    %v1114 = vsel %vm152, %v1106, %v1113
    %v1115 = vrot.slane %v1110, 4
    %v1116 = vsel %vm152, %v1115, %v1098
    %v1117 = vrot.slane %v1098, 4
    %v1118 = vsel %vm152, %v1110, %v1117
    %1119 = vrot.lane.b32.xlu0 %v133, 64
    %v1120 = vpop.permute.xlu0 %1119
    %1121 = vrot.lane.b32.xlu0 %v879, 64
    %v1122 = vpop.permute.xlu0 %1121
    %1123 = vrot.lane.b32.xlu0 %v882, 64
    %v1124 = vpop.permute.xlu0 %1123
    %1125 = vrot.lane.b32.xlu0 %v885, 64
    %v1126 = vpop.permute.xlu0 %1125
    %v1131 = vrot.slane %v1124, 4
    %v1132 = vsel %vm152, %v1131, %v1120
    %v1133 = vrot.slane %v1120, 4
    %v1134 = vsel %vm152, %v1124, %v1133
    %v1136 = vunpack.c.l.s4 1983009808
    %v1137 = vunpack.c.0.s8 %v1136
    %v1138 = vperm.slane %v1132, %v1137
    %v1140 = vunpack.c.l.s4 1983009808
    %v1141 = vunpack.c.0.s8 %v1140
    %v1142 = vperm.slane %v1134, %v1141
    %v1143 = vrot.slane %v1126, 4
    %v1144 = vsel %vm152, %v1143, %v1122
    %v1145 = vrot.slane %v1122, 4
    %v1146 = vsel %vm152, %v1126, %v1145
    %v1148 = vunpack.c.l.s4 1983009808
    %v1149 = vunpack.c.0.s8 %v1148
    %v1150 = vperm.slane %v1144, %v1149
    %v1152 = vunpack.c.l.s4 1983009808
    %v1153 = vunpack.c.0.s8 %v1152
    %v1154 = vperm.slane %v1146, %v1153
    %v1155 = vrot.slane %v1150, 4
    %v1156 = vsel %vm152, %v1155, %v1138
    %v1157 = vrot.slane %v1138, 4
    %v1158 = vsel %vm152, %v1150, %v1157
    %v1160 = vunpack.c.l.s4 1934713408
    %v1161 = vunpack.c.0.s8 %v1160
    %v1162 = vperm.slane %v1156, %v1161
    %v1164 = vunpack.c.l.s4 1934713408
    %v1165 = vunpack.c.0.s8 %v1164
    %v1166 = vperm.slane %v1158, %v1165
    %v1167 = vrot.slane %v1154, 4
    %v1168 = vsel %vm152, %v1167, %v1142
    %v1169 = vrot.slane %v1142, 4
    %v1170 = vsel %vm152, %v1154, %v1169
    %v1172 = vunpack.c.l.s4 1934713408
    %v1173 = vunpack.c.0.s8 %v1172
    %v1174 = vperm.slane %v1168, %v1173
    %v1176 = vunpack.c.l.s4 1934713408
    %v1177 = vunpack.c.0.s8 %v1176
    %v1178 = vperm.slane %v1170, %v1177
    %v1179 = vrot.slane %v1162, 4
    %v1180 = vsel %vm152, 0.0, %v1179
    %v1181 = vrot.slane %v1166, 4
    %v1182 = vsel %vm152, 0.0, %v1181
    %v1183 = vrot.slane %v1174, 4
    %v1184 = vsel %vm152, 0.0, %v1183
    %v1185 = vrot.slane %v1178, 4
    %v1186 = vsel %vm152, 0.0, %v1185
    %v1187 = vsel %vm152, %v1181, %v1162
    %v1189 = vunpack.c.l.s4 1983009808
    %v1190 = vunpack.c.0.s8 %v1189
    %v1191 = vperm.slane %v1187, %v1190
    %v1192 = vrot.slane %v1182, 4
    %v1193 = vsel %vm152, %v1192, %v1180
    %v1195 = vunpack.c.l.s4 1983009808
    %v1196 = vunpack.c.0.s8 %v1195
    %v1197 = vperm.slane %v1193, %v1196
    %v1198 = vsel %vm152, %v1185, %v1174
    %v1200 = vunpack.c.l.s4 1983009808
    %v1201 = vunpack.c.0.s8 %v1200
    %v1202 = vperm.slane %v1198, %v1201
    %v1203 = vrot.slane %v1186, 4
    %v1204 = vsel %vm152, %v1203, %v1184
    %v1206 = vunpack.c.l.s4 1983009808
    %v1207 = vunpack.c.0.s8 %v1206
    %v1208 = vperm.slane %v1204, %v1207
    %v1209 = vrot.slane %v1197, 4
    %v1210 = vsel %vm152, %v1209, %v1191
    %v1211 = vrot.slane %v1191, 4
    %v1212 = vsel %vm152, %v1197, %v1211
    %v1214 = vunpack.c.l.s4 1934713408
    %v1215 = vunpack.c.0.s8 %v1214
    %v1216 = vperm.slane %v1210, %v1215
    %v1218 = vunpack.c.l.s4 1934713408
    %v1219 = vunpack.c.0.s8 %v1218
    %v1220 = vperm.slane %v1212, %v1219
    %v1221 = vrot.slane %v1208, 4
    %v1222 = vsel %vm152, %v1221, %v1202
    %v1223 = vrot.slane %v1202, 4
    %v1224 = vsel %vm152, %v1208, %v1223
    %v1226 = vunpack.c.l.s4 1934713408
    %v1227 = vunpack.c.0.s8 %v1226
    %v1228 = vperm.slane %v1222, %v1227
    %v1230 = vunpack.c.l.s4 1934713408
    %v1231 = vunpack.c.0.s8 %v1230
    %v1232 = vperm.slane %v1224, %v1231
    %v1233 = vrot.slane %v1228, 4
    %v1234 = vsel %vm152, %v1233, %v1216
    %v1235 = vrot.slane %v1216, 4
    %v1236 = vsel %vm152, %v1228, %v1235
    %v1237 = vrot.slane %v1232, 4
    %v1238 = vsel %vm152, %v1237, %v1220
    %v1239 = vrot.slane %v1220, 4
    %v1240 = vsel %vm152, %v1232, %v1239
    %v1242 = vperm.slane %v140, 0
    %v1245 = vsel %vm509, %v990, 0
    %v1248 = vsel %vm509, %v1112, 0
    %1250 = vmatpush.xpose.msra.mxu0 0.0
    %1251 = vmatpush.xpose.msra.mxu0 0.0
    %1252 = vmatpush.xpose.msra.mxu0 0.0
    %1253 = vmatpush.xpose.msra.mxu0 0.0
    %1254 = vmatpush.xpose.msra.mxu0 0.0
    %1255 = vmatpush.xpose.msra.mxu0 0.0
    %1256 = vmatpush.xpose.msra.mxu0 0.0
    %1257 = vmatpush.xpose.msra.mxu0 0.0
    %1258 = vmatpush.xpose.msra.mxu0 0.0
    %1259 = vmatpush.xpose.msra.mxu0 0.0
    %1260 = vmatpush.xpose.msra.mxu0 0.0
    %1261 = vmatpush.xpose.msra.mxu0 0.0
    %1262 = vmatpush.xpose.msra.mxu0 0.0
    %1263 = vmatpush.xpose.msra.mxu0 0.0
    %1264 = vmatpush.xpose.msra.mxu0 0.0
    %1265 = vmatpush.xpose.msra.mxu0 %v1248
    %1266 = vmatmul.f32.gmra.mxu0 %v1245
    %v1267 = vpop.f32.mrf.mxu0
    %v1268 = vadd.f32 %v1242, %v1267
    %1269 = vdwg.mxu0
    %v1271 = vsel %vm509, %v992, 0
    %v1274 = vsel %vm509, %v1114, 0
    %1276 = vmatpush.xpose.msra.mxu0 0.0
    %1277 = vmatpush.xpose.msra.mxu0 0.0
    %1278 = vmatpush.xpose.msra.mxu0 0.0
    %1279 = vmatpush.xpose.msra.mxu0 0.0
    %1280 = vmatpush.xpose.msra.mxu0 0.0
    %1281 = vmatpush.xpose.msra.mxu0 0.0
    %1282 = vmatpush.xpose.msra.mxu0 0.0
    %1283 = vmatpush.xpose.msra.mxu0 0.0
    %1284 = vmatpush.xpose.msra.mxu0 0.0
    %1285 = vmatpush.xpose.msra.mxu0 0.0
    %1286 = vmatpush.xpose.msra.mxu0 0.0
    %1287 = vmatpush.xpose.msra.mxu0 0.0
    %1288 = vmatpush.xpose.msra.mxu0 0.0
    %1289 = vmatpush.xpose.msra.mxu0 0.0
    %1290 = vmatpush.xpose.msra.mxu0 0.0
    %1291 = vmatpush.xpose.msra.mxu0 %v1274
    %1292 = vmatmul.f32.gmra.mxu0 %v1271
    %v1293 = vpop.f32.mrf.mxu0
    %v1294 = vadd.f32 %v1242, %v1293
    %1295 = vdwg.mxu0
    %v1297 = vsel %vm509, %v994, 0
    %v1300 = vsel %vm509, %v1116, 0
    %1302 = vmatpush.xpose.msra.mxu0 0.0
    %1303 = vmatpush.xpose.msra.mxu0 0.0
    %1304 = vmatpush.xpose.msra.mxu0 0.0
    %1305 = vmatpush.xpose.msra.mxu0 0.0
    %1306 = vmatpush.xpose.msra.mxu0 0.0
    %1307 = vmatpush.xpose.msra.mxu0 0.0
    %1308 = vmatpush.xpose.msra.mxu0 0.0
    %1309 = vmatpush.xpose.msra.mxu0 0.0
    %1310 = vmatpush.xpose.msra.mxu0 0.0
    %1311 = vmatpush.xpose.msra.mxu0 0.0
    %1312 = vmatpush.xpose.msra.mxu0 0.0
    %1313 = vmatpush.xpose.msra.mxu0 0.0
    %1314 = vmatpush.xpose.msra.mxu0 0.0
    %1315 = vmatpush.xpose.msra.mxu0 0.0
    %1316 = vmatpush.xpose.msra.mxu0 0.0
    %1317 = vmatpush.xpose.msra.mxu0 %v1300
    %1318 = vmatmul.f32.gmra.mxu0 %v1297
    %v1319 = vpop.f32.mrf.mxu0
    %v1320 = vadd.f32 %v1242, %v1319
    %1321 = vdwg.mxu0
    %v1323 = vsel %vm509, %v996, 0
    %v1326 = vsel %vm509, %v1118, 0
    %1328 = vmatpush.xpose.msra.mxu0 0.0
    %1329 = vmatpush.xpose.msra.mxu0 0.0
    %1330 = vmatpush.xpose.msra.mxu0 0.0
    %1331 = vmatpush.xpose.msra.mxu0 0.0
    %1332 = vmatpush.xpose.msra.mxu0 0.0
    %1333 = vmatpush.xpose.msra.mxu0 0.0
    %1334 = vmatpush.xpose.msra.mxu0 0.0
    %1335 = vmatpush.xpose.msra.mxu0 0.0
    %1336 = vmatpush.xpose.msra.mxu0 0.0
    %1337 = vmatpush.xpose.msra.mxu0 0.0
    %1338 = vmatpush.xpose.msra.mxu0 0.0
    %1339 = vmatpush.xpose.msra.mxu0 0.0
    %1340 = vmatpush.xpose.msra.mxu0 0.0
    %1341 = vmatpush.xpose.msra.mxu0 0.0
    %1342 = vmatpush.xpose.msra.mxu0 0.0
    %1343 = vmatpush.xpose.msra.mxu0 %v1326
    %1344 = vmatmul.f32.gmra.mxu0 %v1323
    %v1345 = vpop.f32.mrf.mxu0
    %v1346 = vadd.f32 %v1242, %v1345
    %1347 = vdwg.mxu0
    %v1348 = vsel %vm509, %v1268, -inf
    %1349 = vmax.xlane.f32.xlu0 %v1348
    %v1350 = vpop.xlane.xlu0 %1349
    %v1351 = vsel %vm509, %v1294, -inf
    %1352 = vmax.xlane.f32.xlu0 %v1351
    %v1353 = vpop.xlane.xlu0 %1352
    %v1354 = vsel %vm509, %v1320, -inf
    %1355 = vmax.xlane.f32.xlu0 %v1354
    %v1356 = vpop.xlane.xlu0 %1355
    %v1357 = vsel %vm509, %v1346, -inf
    %1358 = vmax.xlane.f32.xlu0 %v1357
    %v1359 = vpop.xlane.xlu0 %1358
    %v1360 = vsub.f32 %v1268, %v1350
    %v1361 = vsub.f32 %v1294, %v1353
    %v1362 = vsub.f32 %v1320, %v1356
    %v1363 = vsub.f32 %v1346, %v1359
    %v1364 = vmul.f32 %v1360, 1.442695
    %v1365 = vpow.pop %v1364
    %v1366 = vmul.f32 %v1361, 1.442695
    %v1367 = vpow.pop %v1366
    %v1368 = vmul.f32 %v1362, 1.442695
    %v1369 = vpow.pop %v1368
    %v1370 = vmul.f32 %v1363, 1.442695
    %v1371 = vpow.pop %v1370
    %v1372 = vsel %vm509, %v1365, 0.0
    %1373 = vadd.xlane.f32.xlu0 %v1372
    %v1374 = vpop.xlane.xlu0 %1373
    %v1375 = vsel %vm509, %v1367, 0.0
    %1376 = vadd.xlane.f32.xlu0 %v1375
    %v1377 = vpop.xlane.xlu0 %1376
    %v1378 = vsel %vm509, %v1369, 0.0
    %1379 = vadd.xlane.f32.xlu0 %v1378
    %v1380 = vpop.xlane.xlu0 %1379
    %v1381 = vsel %vm509, %v1371, 0.0
    %1382 = vadd.xlane.f32.xlu0 %v1381
    %v1383 = vpop.xlane.xlu0 %1382
    %v1384 = vrcp.pop %v1374
    %v1385 = vrcp.pop %v1377
    %v1386 = vrcp.pop %v1380
    %v1387 = vrcp.pop %v1383
    %v1388 = vmul.f32 %v1365, %v1384
    %v1389 = vmul.f32 %v1367, %v1385
    %v1390 = vmul.f32 %v1369, %v1386
    %v1391 = vmul.f32 %v1371, %v1387
    %v1393 = vsel %vm509, %v1388, 0
    %1395 = vmatpush.msra.mxu0 0.0
    %1396 = vmatpush.msra.mxu0 0.0
    %1397 = vmatpush.msra.mxu0 0.0
    %1398 = vmatpush.msra.mxu0 0.0
    %1399 = vmatpush.msra.mxu0 0.0
    %1400 = vmatpush.msra.mxu0 0.0
    %1401 = vmatpush.msra.mxu0 0.0
    %1402 = vmatpush.msra.mxu0 0.0
    %1403 = vmatpush.msra.mxu0 0.0
    %1404 = vmatpush.msra.mxu0 0.0
    %1405 = vmatpush.msra.mxu0 0.0
    %1406 = vmatpush.msra.mxu0 0.0
    %1407 = vmatpush.msra.mxu0 0.0
    %1408 = vmatpush.msra.mxu0 0.0
    %1409 = vmatpush.msra.mxu0 0.0
    %1410 = vmatpush.msra.mxu0 %v1234
    %1411 = vmatmul.f32.gmra.mxu0 %v1393
    %v1412 = vpop.f32.mrf.mxu0
    %v1413 = vadd.f32 0.0, %v1412
    %1414 = vdwg.mxu0
    %v1416 = vsel %vm509, %v1389, 0
    %1418 = vmatpush.msra.mxu0 0.0
    %1419 = vmatpush.msra.mxu0 0.0
    %1420 = vmatpush.msra.mxu0 0.0
    %1421 = vmatpush.msra.mxu0 0.0
    %1422 = vmatpush.msra.mxu0 0.0
    %1423 = vmatpush.msra.mxu0 0.0
    %1424 = vmatpush.msra.mxu0 0.0
    %1425 = vmatpush.msra.mxu0 0.0
    %1426 = vmatpush.msra.mxu0 0.0
    %1427 = vmatpush.msra.mxu0 0.0
    %1428 = vmatpush.msra.mxu0 0.0
    %1429 = vmatpush.msra.mxu0 0.0
    %1430 = vmatpush.msra.mxu0 0.0
    %1431 = vmatpush.msra.mxu0 0.0
    %1432 = vmatpush.msra.mxu0 0.0
    %1433 = vmatpush.msra.mxu0 %v1236
    %1434 = vmatmul.f32.gmra.mxu0 %v1416
    %v1435 = vpop.f32.mrf.mxu0
    %v1436 = vadd.f32 0.0, %v1435
    %1437 = vdwg.mxu0
    %v1439 = vsel %vm509, %v1390, 0
    %1441 = vmatpush.msra.mxu0 0.0
    %1442 = vmatpush.msra.mxu0 0.0
    %1443 = vmatpush.msra.mxu0 0.0
    %1444 = vmatpush.msra.mxu0 0.0
    %1445 = vmatpush.msra.mxu0 0.0
    %1446 = vmatpush.msra.mxu0 0.0
    %1447 = vmatpush.msra.mxu0 0.0
    %1448 = vmatpush.msra.mxu0 0.0
    %1449 = vmatpush.msra.mxu0 0.0
    %1450 = vmatpush.msra.mxu0 0.0
    %1451 = vmatpush.msra.mxu0 0.0
    %1452 = vmatpush.msra.mxu0 0.0
    %1453 = vmatpush.msra.mxu0 0.0
    %1454 = vmatpush.msra.mxu0 0.0
    %1455 = vmatpush.msra.mxu0 0.0
    %1456 = vmatpush.msra.mxu0 %v1238
    %1457 = vmatmul.f32.gmra.mxu0 %v1439
    %v1458 = vpop.f32.mrf.mxu0
    %v1459 = vadd.f32 0.0, %v1458
    %1460 = vdwg.mxu0
    %v1462 = vsel %vm509, %v1391, 0
    %1464 = vmatpush.msra.mxu0 0.0
    %1465 = vmatpush.msra.mxu0 0.0
    %1466 = vmatpush.msra.mxu0 0.0
    %1467 = vmatpush.msra.mxu0 0.0
    %1468 = vmatpush.msra.mxu0 0.0
    %1469 = vmatpush.msra.mxu0 0.0
    %1470 = vmatpush.msra.mxu0 0.0
    %1471 = vmatpush.msra.mxu0 0.0
    %1472 = vmatpush.msra.mxu0 0.0
    %1473 = vmatpush.msra.mxu0 0.0
    %1474 = vmatpush.msra.mxu0 0.0
    %1475 = vmatpush.msra.mxu0 0.0
    %1476 = vmatpush.msra.mxu0 0.0
    %1477 = vmatpush.msra.mxu0 0.0
    %1478 = vmatpush.msra.mxu0 0.0
    %1479 = vmatpush.msra.mxu0 %v1240
    %1480 = vmatmul.f32.gmra.mxu0 %v1462
    %v1481 = vpop.f32.mrf.mxu0
    %v1482 = vadd.f32 0.0, %v1481
    %1483 = vdwg.mxu0
    %v1484 = vrot.slane %v1459, 4
    %v1485 = vsel %vm152, %v1484, %v1413
    %v1486 = vrot.slane %v1413, 4
    %v1487 = vsel %vm152, %v1459, %v1486
    %v1489 = vunpack.c.l.s4 1983009808
    %v1490 = vunpack.c.0.s8 %v1489
    %v1491 = vperm.slane %v1485, %v1490
    %v1493 = vunpack.c.l.s4 1983009808
    %v1494 = vunpack.c.0.s8 %v1493
    %v1495 = vperm.slane %v1487, %v1494
    %v1496 = vrot.slane %v1482, 4
    %v1497 = vsel %vm152, %v1496, %v1436
    %v1498 = vrot.slane %v1436, 4
    %v1499 = vsel %vm152, %v1482, %v1498
    %v1501 = vunpack.c.l.s4 1983009808
    %v1502 = vunpack.c.0.s8 %v1501
    %v1503 = vperm.slane %v1497, %v1502
    %v1505 = vunpack.c.l.s4 1983009808
    %v1506 = vunpack.c.0.s8 %v1505
    %v1507 = vperm.slane %v1499, %v1506
    %v1508 = vrot.slane %v1503, 4
    %v1509 = vsel %vm152, %v1508, %v1491
    %v1510 = vrot.slane %v1491, 4
    %v1511 = vsel %vm152, %v1503, %v1510
    %v1513 = vunpack.c.l.s4 1934713408
    %v1514 = vunpack.c.0.s8 %v1513
    %v1515 = vperm.slane %v1509, %v1514
    %v1517 = vunpack.c.l.s4 1934713408
    %v1518 = vunpack.c.0.s8 %v1517
    %v1519 = vperm.slane %v1511, %v1518
    %v1520 = vrot.slane %v1507, 4
    %v1521 = vsel %vm152, %v1520, %v1495
    %v1522 = vrot.slane %v1495, 4
    %v1523 = vsel %vm152, %v1507, %v1522
    %v1525 = vunpack.c.l.s4 1934713408
    %v1526 = vunpack.c.0.s8 %v1525
    %v1527 = vperm.slane %v1521, %v1526
    %v1529 = vunpack.c.l.s4 1934713408
    %v1530 = vunpack.c.0.s8 %v1529
    %v1531 = vperm.slane %v1523, %v1530
    %v1532 = vrot.slane %v1515, 4
    %v1533 = vsel %vm152, 0.0, %v1532
    %v1534 = vrot.slane %v1519, 4
    %v1535 = vsel %vm152, 0.0, %v1534
    %v1536 = vrot.slane %v1527, 4
    %v1537 = vsel %vm152, 0.0, %v1536
    %v1538 = vrot.slane %v1531, 4
    %v1539 = vsel %vm152, 0.0, %v1538
    %v1540 = vsel %vm152, %v1534, %v1515
    %v1542 = vunpack.c.l.s4 1983009808
    %v1543 = vunpack.c.0.s8 %v1542
    %v1544 = vperm.slane %v1540, %v1543
    %v1545 = vrot.slane %v1535, 4
    %v1546 = vsel %vm152, %v1545, %v1533
    %v1548 = vunpack.c.l.s4 1983009808
    %v1549 = vunpack.c.0.s8 %v1548
    %v1550 = vperm.slane %v1546, %v1549
    %v1551 = vsel %vm152, %v1538, %v1527
    %v1553 = vunpack.c.l.s4 1983009808
    %v1554 = vunpack.c.0.s8 %v1553
    %v1555 = vperm.slane %v1551, %v1554
    %v1556 = vrot.slane %v1539, 4
    %v1557 = vsel %vm152, %v1556, %v1537
    %v1559 = vunpack.c.l.s4 1983009808
    %v1560 = vunpack.c.0.s8 %v1559
    %v1561 = vperm.slane %v1557, %v1560
    %v1562 = vrot.slane %v1550, 4
    %v1563 = vsel %vm152, %v1562, %v1544
    %v1564 = vrot.slane %v1544, 4
    %v1565 = vsel %vm152, %v1550, %v1564
    %v1567 = vunpack.c.l.s4 1934713408
    %v1568 = vunpack.c.0.s8 %v1567
    %v1569 = vperm.slane %v1563, %v1568
    %v1571 = vunpack.c.l.s4 1934713408
    %v1572 = vunpack.c.0.s8 %v1571
    %v1573 = vperm.slane %v1565, %v1572
    %v1574 = vrot.slane %v1561, 4
    %v1575 = vsel %vm152, %v1574, %v1555
    %v1576 = vrot.slane %v1555, 4
    %v1577 = vsel %vm152, %v1561, %v1576
    %v1579 = vunpack.c.l.s4 1934713408
    %v1580 = vunpack.c.0.s8 %v1579
    %v1581 = vperm.slane %v1575, %v1580
    %v1583 = vunpack.c.l.s4 1934713408
    %v1584 = vunpack.c.0.s8 %v1583
    %v1585 = vperm.slane %v1577, %v1584
    %v1586 = vrot.slane %v1581, 4
    %v1587 = vsel %vm152, %v1586, %v1569
    %v1588 = vrot.slane %v1569, 4
    %v1589 = vsel %vm152, %v1581, %v1588
    %v1590 = vrot.slane %v1585, 4
    %v1591 = vsel %vm152, %v1590, %v1573
    %v1592 = vrot.slane %v1573, 4
    %v1593 = vsel %vm152, %v1585, %v1592
    %1595 = vrot.lane.b32.xlu0 %v1589, 8
    %v1596 = vpop.permute.xlu0 %1595
    %1599 = vrot.lane.b32.xlu0 %v1591, 16
    %v1600 = vpop.permute.xlu0 %1599
    %1603 = vrot.lane.b32.xlu0 %v1593, 24
    %v1604 = vpop.permute.xlu0 %1603
    %v1606 = vsel %vm509, %v1587, %v1596
    %v1607 = vsel %vm873, %v1606, %v1600
    %v1608 = vsel %vm875, %v1607, %v1604
    %v1609 = vld [vmem:[#allocation8] sm:$0xff]
    %v1610 = vld [vmem:[#allocation8 + $0x8] sm:$0xff]
    %v1611 = vld [vmem:[#allocation8 + $0x10] sm:$0xff]
    %v1612 = vld [vmem:[#allocation8 + $0x18] sm:$0xff]
    %v1613 = vld [vmem:[%s5] sm:$0x1]
    %v1615 = vperm.slane %v1613, 0
    %vm1617 = vcmask 261120
    %v1619 = vsel %vm1617, %v876, 0
    %v1622 = vsel %vm1617, %v1608, 0
    %1624 = vmatpush.msra.mxu0 0.0
    %1625 = vmatpush.msra.mxu0 0.0
    %1626 = vmatpush.msra.mxu0 0.0
    %1627 = vmatpush.msra.mxu0 0.0
    %1628 = vmatpush.msra.mxu0 0.0
    %1629 = vmatpush.msra.mxu0 0.0
    %1630 = vmatpush.msra.mxu0 0.0
    %1631 = vmatpush.msra.mxu0 0.0
    %1632 = vmatpush.msra.mxu0 0.0
    %1633 = vmatpush.msra.mxu0 0.0
    %1634 = vmatpush.msra.mxu0 0.0
    %1635 = vmatpush.msra.mxu0 0.0
    %1636 = vmatpush.msra.mxu0 %v1612
    %1637 = vmatpush.msra.mxu0 %v1611
    %1638 = vmatpush.msra.mxu0 %v1610
    %1639 = vmatpush.msra.mxu0 %v1609
    %1640 = vmatmul.f32.gmra.mxu0 %v1619
    %v1641 = vpop.f32.mrf.mxu0
    %v1642 = vadd.f32 %v1615, %v1641
    %1643 = vmatmul.f32.gmra.mxu0 %v1622
    %v1644 = vpop.f32.mrf.mxu0
    %v1645 = vadd.f32 %v1615, %v1644
    %1646 = vdwg.mxu0
    %1647 = vst.msk [vmem:[#allocation10] sm:$0xff] %vm1617, %v1642
    %1648 = vst.msk [vmem:[#allocation10 + $0x8] sm:$0xff] %vm1617, %v1645
    // Predicated region
    $region42: #{tpu_custom_call.1} parent=1 // pred_check
      _
    $region43: #{tpu_custom_call.1} parent=1 // pred_check_branch
      %1650 = sbr.rel (0) target = $region45
    $region44: #{tpu_custom_call.1} parent=1 // pred_region
      %1652 = vsyncadd [#allocation4], 0
      %s1653 = sshll.u32 [#allocation10], 4
      %s1654 = int_to_ptr.vmem [resolvable:$true] %s1653
      %s1655 = sshll.u32 %s6, 4
      %s1656 = int_to_ptr.hbm [resolvable:$true] %s1655
      %1661 = dma.vmem_to_hbm [thread:$0]  %s1654, 256, %s1656, [#allocation4], 128, 128, 8
    $region45: #{tpu_custom_call.1} parent=1 // pred_fallthru
      _
    // Predicated region
    $region46: #{tpu_custom_call.1} parent=1 // pred_check
      _
    $region47: #{tpu_custom_call.1} parent=1 // pred_check_branch
      %1663 = sbr.rel (0) target = $region49
    $region48: #{tpu_custom_call.1} parent=1 // pred_region
      %1665 = dma.done [#allocation4], 256
    $region49: #{tpu_custom_call.1} parent=1 // pred_fallthru
      _
    %1666 = vsyncpa [#allocation3], 1
    %1667 = vsyncpa [#allocation6], 1
    %1668 = vsyncpa [#allocation9], 1
    %1669 = vsyncpa [#allocation4], 1

</llo_original>
